<compile_context>
chip_gen: v7x
topology: tpu7x:2x2x1
jax: 0.10.0
libtpu: 0.0.40
codegen_flags: <defaults>
</compile_context>

<pallas_src>
import jax
import jax.numpy as jnp
from jax.experimental import pallas as pl
from jax.experimental.pallas import tpu as pltpu


# ---------------------------------------------------------------------------
# Fused single-kernel path (preferred)
# ---------------------------------------------------------------------------
def _fused_block_kernel(idx_ref, msk_ref, x_ref, w1_ref, b1_ref, w2_ref,
                        b2_ref, o_ref):
    # idx_ref: (K, N) int32  neighbor index per tap, pad slot clamped to 0
    # msk_ref: (K, N) f32    1.0 for real neighbors, 0.0 for the zero-pad slot
    # x_ref  : (C, N) f32    residual input row (batch dim squeezed away)
    # w*_ref : (K, C, C) f32 per-tap weights, w[t, o, c] = conv.weight[o, c, t]
    # b*_ref : (C, 1) f32
    # o_ref  : (C, N) f32
    C, N = x_ref.shape
    K = idx_ref.shape[0]
    x = x_ref[...]

    def sph_conv(act, w_ref, b_ref):
        # act: (C, N); the PyTorch zero pad column is emulated by the mask.
        h = jnp.zeros((C, N), dtype=jnp.float32)
        for t in range(K):  # static unroll over the 9 spherical taps
            idx_t = jnp.broadcast_to(idx_ref[pl.ds(t, 1), :], (C, N))
            msk_t = jnp.broadcast_to(msk_ref[pl.ds(t, 1), :], (C, N))
            g_t = jnp.take_along_axis(act, idx_t, axis=1) * msk_t
            h = h + jnp.dot(w_ref[t], g_t, preferred_element_type=jnp.float32)
        return h + b_ref[...]

    a1 = jnp.maximum(sph_conv(jnp.maximum(x, 0.0), w1_ref, b1_ref), 0.0)
    o_ref[...] = sph_conv(a1, w2_ref, b2_ref) + x


def _fused_compiler_params(C, N, K):
    elt = 4
    need = (2 * 2 * C * N * elt        # double-buffered x / out blocks
            + 2 * K * C * C * elt      # both resident per-tap weight stacks
            + 2 * K * N * elt          # neighbor indices + pad mask
            + 8 * C * N * elt          # in-kernel f32 temporaries
            + (4 << 20))               # headroom
    limit = max(need, 32 << 20)
    try:  # VMEM-aware cap: v7x has 64 MiB physical vs 128 MiB on v5e/v6e
        cap = int(pltpu.get_tpu_info().vmem_capacity_bytes)
        limit = min(limit, int(cap * 0.9))
    except Exception:
        limit = min(limit, 48 << 20)
    return pltpu.CompilerParams(dimension_semantics=("parallel",),
                                vmem_limit_bytes=int(limit))


@jax.jit
def residual_conv_block_fused(x, neighbor_map, w1, b1, w2, b2):
    """x: (B, C, 1, N) f32; neighbor_map: (N, 9) int in [0, N] (N = pad slot);
    w1, w2: (C, C, 9) Conv1d weights; b1, b2: (C,) biases."""
    B, C, _, N = x.shape
    K = neighbor_map.shape[-1]

    x_flat = x.reshape(B, C, N).astype(jnp.float32)          # free reshape
    nm_t = jnp.transpose(neighbor_map.astype(jnp.int32), (1, 0))   # (K, N)
    valid = (nm_t >= 0) & (nm_t < N)                          # pad slot == N
    idx = jnp.where(valid, nm_t, 0)
    msk = valid.astype(jnp.float32)
    w1t = jnp.transpose(w1.astype(jnp.float32), (2, 0, 1))    # (K, C, C)
    w2t = jnp.transpose(w2.astype(jnp.float32), (2, 0, 1))
    b1c = b1.reshape(C, 1).astype(jnp.float32)
    b2c = b2.reshape(C, 1).astype(jnp.float32)

    # NOTE: with B == 1 the grid has a single block and one v7x TensorCore
    # idles; gathers need the full N row resident so N cannot be tiled here.
    out = pl.pallas_call(
        _fused_block_kernel,
        out_shape=jax.ShapeDtypeStruct((B, C, N), jnp.float32),
        grid_spec=pltpu.PrefetchScalarGridSpec(
            num_scalar_prefetch=0,
            grid=(B,),
            in_specs=[
                pl.BlockSpec((K, N), lambda b: (0, 0)),                  # idx
                pl.BlockSpec((K, N), lambda b: (0, 0)),                  # mask
                pl.BlockSpec((pl.Squeezed(), C, N), lambda b: (b, 0, 0)),  # x
                pl.BlockSpec((K, C, C), lambda b: (0, 0, 0)),            # w1
                pl.BlockSpec((C, 1), lambda b: (0, 0)),                  # b1
                pl.BlockSpec((K, C, C), lambda b: (0, 0, 0)),            # w2
                pl.BlockSpec((C, 1), lambda b: (0, 0)),                  # b2
            ],
            out_specs=pl.BlockSpec((pl.Squeezed(), C, N), lambda b: (b, 0, 0)),
        ),
        compiler_params=_fused_compiler_params(C, N, K),
    )(idx, msk, x_flat, w1t, b1c, w2t, b2c)

    return out.reshape(B, C, 1, N).astype(x.dtype)


# ---------------------------------------------------------------------------
# Staged fallback (XLA-side gather + two matmul kernels) — known-good path
# ---------------------------------------------------------------------------
def _staged_conv1_kernel(g_ref, w_ref, b_ref, o_ref):
    # g: (1, 9C, Nt) gathered relu(x); o = relu(w @ g + b)
    h = jnp.dot(w_ref[...], g_ref[0], preferred_element_type=jnp.float32)
    o_ref[0] = jnp.maximum(h + b_ref[...], 0.0)


def _staged_conv2_kernel(g_ref, w_ref, b_ref, x_ref, o_ref):
    # g: (1, 9C, Nt) gathered stage-1 activations; o = w @ g + b + x
    h = jnp.dot(w_ref[...], g_ref[0], preferred_element_type=jnp.float32)
    o_ref[0] = h + b_ref[...] + x_ref[0]


def _spatial_tile(n):
    if n <= 1024:
        return n
    for t in (2048, 1024, 512, 256, 128):
        if n % t == 0:
            return t
    return n  # TODO(synk): pad ragged N to a multiple of 128 in the wrapper.


def _tap_gather(a, idx_tap_major, n, k):
    """a: (B, C, n) -> (B, C*k, n); row r = c*k + t holds a_pad[:, c, nm[:, t]]."""
    b, c, _ = a.shape
    a_pad = jnp.concatenate([a, jnp.zeros((b, c, 1), a.dtype)], axis=-1)
    g = jnp.take(a_pad, idx_tap_major, axis=2)          # (B, C, k*n)
    return g.reshape(b, c * k, n)


@jax.jit
def residual_conv_block_staged(x, neighbor_map, w1, b1, w2, b2):
    B, C, _, N = x.shape
    K = neighbor_map.shape[-1]
    nt = _spatial_tile(N)

    x_flat = x.reshape(B, C, N).astype(jnp.float32)
    idx_tn = jnp.transpose(neighbor_map.astype(jnp.int32), (1, 0)).reshape(-1)
    w1f = w1.reshape(C, C * K).astype(jnp.float32)
    w2f = w2.reshape(C, C * K).astype(jnp.float32)
    b1c = b1.reshape(C, 1).astype(jnp.float32)
    b2c = b2.reshape(C, 1).astype(jnp.float32)

    grid = (B, N // nt)
    g_spec = pl.BlockSpec((1, C * K, nt), lambda b, n: (b, 0, n))
    w_spec = pl.BlockSpec((C, C * K), lambda b, n: (0, 0))
    b_spec = pl.BlockSpec((C, 1), lambda b, n: (0, 0))
    xo_spec = pl.BlockSpec((1, C, nt), lambda b, n: (b, 0, n))
    cparams = pltpu.CompilerParams(dimension_semantics=("parallel", "parallel"))

    g1 = _tap_gather(jnp.maximum(x_flat, 0.0), idx_tn, N, K)
    a1 = pl.pallas_call(
        _staged_conv1_kernel,
        out_shape=jax.ShapeDtypeStruct((B, C, N), jnp.float32),
        grid_spec=pltpu.PrefetchScalarGridSpec(
            num_scalar_prefetch=0, grid=grid,
            in_specs=[g_spec, w_spec, b_spec], out_specs=xo_spec),
        compiler_params=cparams,
    )(g1, w1f, b1c)

    g2 = _tap_gather(a1, idx_tn, N, K)
    out = pl.pallas_call(
        _staged_conv2_kernel,
        out_shape=jax.ShapeDtypeStruct((B, C, N), jnp.float32),
        grid_spec=pltpu.PrefetchScalarGridSpec(
            num_scalar_prefetch=0, grid=grid,
            in_specs=[g_spec, w_spec, b_spec, xo_spec], out_specs=xo_spec),
        compiler_params=cparams,
    )(g2, w2f, b2c, x_flat)

    return out.reshape(B, C, 1, N).astype(x.dtype)


# ---------------------------------------------------------------------------
# Pure-JAX reference of the PyTorch forward (bn=False, ReLU)
# ---------------------------------------------------------------------------
def reference_forward(x, neighbor_map, w1, b1, w2, b2):
    B, C, _, N = x.shape
    K = neighbor_map.shape[-1]
    hp = jax.lax.Precision.HIGHEST

    def sph_conv(a, w, bias):
        a_pad = jnp.concatenate([a, jnp.zeros((B, C, 1), a.dtype)], axis=-1)
        v = jnp.take(a_pad, neighbor_map.reshape(-1), axis=2).reshape(B, C, N, K)
        return jnp.einsum("ock,bcnk->bon", w, v, precision=hp) + bias[None, :, None]

    xf = x.reshape(B, C, N)
    h = sph_conv(jnp.maximum(xf, 0.0), w1, b1)
    out = sph_conv(jnp.maximum(h, 0.0), w2, b2) + xf
    return out.reshape(B, C, 1, N)


if __name__ == "__main__":
    key = jax.random.PRNGKey(0)
    kx, kn, kw1, kb1, kw2, kb2 = jax.random.split(key, 6)

    B, C, N, K = 2, 32, 256, 9  # small shapes consistent with the module

    x = jax.random.normal(kx, (B, C, 1, N), dtype=jnp.float32)
    # Synthetic spherical neighbor map: 9 neighbor indices per vertex in
    # [0, N]; index N addresses the zero-padding column (as in SphConv2d).
    neighbor_map = jax.random.randint(kn, (N, K), 0, N + 1, dtype=jnp.int32)
    scale = 1.0 / float(C * K) ** 0.5
    w1 = jax.random.normal(kw1, (C, C, K), dtype=jnp.float32) * scale
    b1 = jax.random.normal(kb1, (C,), dtype=jnp.float32) * 0.1
    w2 = jax.random.normal(kw2, (C, C, K), dtype=jnp.float32) * scale
    b2 = jax.random.normal(kb2, (C,), dtype=jnp.float32) * 0.1

    ref = reference_forward(x, neighbor_map, w1, b1, w2, b2)

    out = None
    try:
        out = jax.block_until_ready(
            residual_conv_block_fused(x, neighbor_map, w1, b1, w2, b2))
        if not bool(jnp.allclose(out, ref, atol=1e-3, rtol=1e-3)):
            out = None
    except Exception:
        out = None

    if out is None:
        # Mosaic build without in-kernel lane-gather support: use the staged
        # (XLA gather + Pallas matmul) pipeline instead.
        out = jax.block_until_ready(
            residual_conv_block_staged(x, neighbor_map, w1, b1, w2, b2))

    assert out.shape == x.shape and out.dtype == x.dtype
    err = float(jnp.max(jnp.abs(out - ref)))
    assert jnp.allclose(out, ref, atol=1e-3, rtol=1e-3), err
    print("KERNEL_OK")
</pallas_src>

<mosaic_0001>
module attributes {stable_mosaic.version = 11 : i64} {
  func.func @_fused_block_kernel(%arg0: i32, %arg1: memref<9x256xi32, #tpu.memory_space<vmem>>, %arg2: memref<9x256xf32, #tpu.memory_space<vmem>>, %arg3: memref<1x32x256xf32, #tpu.memory_space<vmem>>, %arg4: memref<9x32x32xf32, #tpu.memory_space<vmem>>, %arg5: memref<32x1xf32, #tpu.memory_space<vmem>>, %arg6: memref<9x32x32xf32, #tpu.memory_space<vmem>>, %arg7: memref<32x1xf32, #tpu.memory_space<vmem>>, %arg8: memref<1x32x256xf32, #tpu.memory_space<vmem>>) attributes {dimension_semantics = [#tpu.dimension_semantics<parallel>], iteration_bounds = array<i64: 2>, scalar_prefetch = 0 : i64, scratch_operands = 0 : i64, tpu.core_type = #tpu.core_type<tc>, window_params = [{pipeline_mode = #tpu.pipeline_mode<synchronous>, transform_indices = @transform_0, window_bounds = array<i64: 9, 256>}, {pipeline_mode = #tpu.pipeline_mode<synchronous>, transform_indices = @transform_1, window_bounds = array<i64: 9, 256>}, {transform_indices = @transform_2, window_bounds = array<i64: 1, 32, 256>}, {pipeline_mode = #tpu.pipeline_mode<synchronous>, transform_indices = @transform_3, window_bounds = array<i64: 9, 32, 32>}, {pipeline_mode = #tpu.pipeline_mode<synchronous>, transform_indices = @transform_4, window_bounds = array<i64: 32, 1>}, {pipeline_mode = #tpu.pipeline_mode<synchronous>, transform_indices = @transform_5, window_bounds = array<i64: 9, 32, 32>}, {pipeline_mode = #tpu.pipeline_mode<synchronous>, transform_indices = @transform_6, window_bounds = array<i64: 32, 1>}, {transform_indices = @transform_7, window_bounds = array<i64: 1, 32, 256>}]} {
    %c0 = arith.constant 0 : index
    %c0_0 = arith.constant 0 : index
    %c0_1 = arith.constant 0 : index
    %0 = vector.load %arg3[%c0, %c0_0, %c0_1] : memref<1x32x256xf32, #tpu.memory_space<vmem>>, vector<1x32x256xf32>
    %1 = vector.shape_cast %0 : vector<1x32x256xf32> to vector<32x256xf32>
    %cst = arith.constant 0.000000e+00 : f32
    %2 = vector.broadcast %cst : f32 to vector<32x256xf32>
    %3 = arith.maximumf %1, %2 : vector<32x256xf32>
    %cst_2 = arith.constant 0.000000e+00 : f32
    %4 = vector.broadcast %cst_2 : f32 to vector<32x256xf32>
    %c0_3 = arith.constant 0 : index
    %c0_4 = arith.constant 0 : index
    %5 = vector.load %arg1[%c0_3, %c0_4] : memref<9x256xi32, #tpu.memory_space<vmem>>, vector<1x256xi32>
    %6 = vector.shape_cast %5 : vector<1x256xi32> to vector<1x256xi32>
    %7 = vector.broadcast %6 : vector<1x256xi32> to vector<32x256xi32>
    %c0_5 = arith.constant 0 : index
    %c0_6 = arith.constant 0 : index
    %8 = vector.load %arg2[%c0_5, %c0_6] : memref<9x256xf32, #tpu.memory_space<vmem>>, vector<1x256xf32>
    %9 = vector.shape_cast %8 : vector<1x256xf32> to vector<1x256xf32>
    %10 = vector.broadcast %9 : vector<1x256xf32> to vector<32x256xf32>
    %c0_i32 = arith.constant 0 : i32
    %11 = vector.broadcast %c0_i32 : i32 to vector<32x256xi32>
    %12 = arith.cmpi slt, %7, %11 : vector<32x256xi32>
    %c256_i32 = arith.constant 256 : i32
    %13 = vector.broadcast %c256_i32 : i32 to vector<32x256xi32>
    %14 = arith.addi %7, %13 : vector<32x256xi32>
    %15 = arith.select %12, %14, %7 : vector<32x256xi1>, vector<32x256xi32>
    %16 = vector.shape_cast %15 : vector<32x256xi32> to vector<32x256x1xi32>
    %17 = vector.shape_cast %16 : vector<32x256x1xi32> to vector<32x256xi32>
    %18 = tpu.dynamic_gather %3[%17] in [1] : vector<32x256xf32>, vector<32x256xi32> -> vector<32x256xf32>
    %19 = arith.mulf %18, %10 : vector<32x256xf32>
    %c0_7 = arith.constant 0 : index
    %c0_8 = arith.constant 0 : index
    %c0_9 = arith.constant 0 : index
    %20 = vector.load %arg4[%c0_7, %c0_8, %c0_9] : memref<9x32x32xf32, #tpu.memory_space<vmem>>, vector<1x32x32xf32>
    %21 = vector.shape_cast %20 : vector<1x32x32xf32> to vector<32x32xf32>
    %cst_10 = arith.constant dense<0.000000e+00> : vector<32x256xf32>
    %22 = tpu.matmul %21, %19, %cst_10 {dimension_numbers = #tpu.dot_dimension_numbers<[1], [0], [0], [1], [0, 0, 1, 1], [], []>} : vector<32x32xf32>, vector<32x256xf32>, vector<32x256xf32> -> vector<32x256xf32>
    %23 = arith.addf %4, %22 : vector<32x256xf32>
    %c1 = arith.constant 1 : index
    %c0_11 = arith.constant 0 : index
    %24 = vector.load %arg1[%c1, %c0_11] : memref<9x256xi32, #tpu.memory_space<vmem>>, vector<1x256xi32>
    %25 = vector.shape_cast %24 : vector<1x256xi32> to vector<1x256xi32>
    %26 = vector.broadcast %25 : vector<1x256xi32> to vector<32x256xi32>
    %c1_12 = arith.constant 1 : index
    %c0_13 = arith.constant 0 : index
    %27 = vector.load %arg2[%c1_12, %c0_13] : memref<9x256xf32, #tpu.memory_space<vmem>>, vector<1x256xf32>
    %28 = vector.shape_cast %27 : vector<1x256xf32> to vector<1x256xf32>
    %29 = vector.broadcast %28 : vector<1x256xf32> to vector<32x256xf32>
    %c0_i32_14 = arith.constant 0 : i32
    %30 = vector.broadcast %c0_i32_14 : i32 to vector<32x256xi32>
    %31 = arith.cmpi slt, %26, %30 : vector<32x256xi32>
    %c256_i32_15 = arith.constant 256 : i32
    %32 = vector.broadcast %c256_i32_15 : i32 to vector<32x256xi32>
    %33 = arith.addi %26, %32 : vector<32x256xi32>
    %34 = arith.select %31, %33, %26 : vector<32x256xi1>, vector<32x256xi32>
    %35 = vector.shape_cast %34 : vector<32x256xi32> to vector<32x256x1xi32>
    %36 = vector.shape_cast %35 : vector<32x256x1xi32> to vector<32x256xi32>
    %37 = tpu.dynamic_gather %3[%36] in [1] : vector<32x256xf32>, vector<32x256xi32> -> vector<32x256xf32>
    %38 = arith.mulf %37, %29 : vector<32x256xf32>
    %c1_16 = arith.constant 1 : index
    %c0_17 = arith.constant 0 : index
    %c0_18 = arith.constant 0 : index
    %39 = vector.load %arg4[%c1_16, %c0_17, %c0_18] : memref<9x32x32xf32, #tpu.memory_space<vmem>>, vector<1x32x32xf32>
    %40 = vector.shape_cast %39 : vector<1x32x32xf32> to vector<32x32xf32>
    %cst_19 = arith.constant dense<0.000000e+00> : vector<32x256xf32>
    %41 = tpu.matmul %40, %38, %cst_19 {dimension_numbers = #tpu.dot_dimension_numbers<[1], [0], [0], [1], [0, 0, 1, 1], [], []>} : vector<32x32xf32>, vector<32x256xf32>, vector<32x256xf32> -> vector<32x256xf32>
    %42 = arith.addf %23, %41 : vector<32x256xf32>
    %c2 = arith.constant 2 : index
    %c0_20 = arith.constant 0 : index
    %43 = vector.load %arg1[%c2, %c0_20] : memref<9x256xi32, #tpu.memory_space<vmem>>, vector<1x256xi32>
    %44 = vector.shape_cast %43 : vector<1x256xi32> to vector<1x256xi32>
    %45 = vector.broadcast %44 : vector<1x256xi32> to vector<32x256xi32>
    %c2_21 = arith.constant 2 : index
    %c0_22 = arith.constant 0 : index
    %46 = vector.load %arg2[%c2_21, %c0_22] : memref<9x256xf32, #tpu.memory_space<vmem>>, vector<1x256xf32>
    %47 = vector.shape_cast %46 : vector<1x256xf32> to vector<1x256xf32>
    %48 = vector.broadcast %47 : vector<1x256xf32> to vector<32x256xf32>
    %c0_i32_23 = arith.constant 0 : i32
    %49 = vector.broadcast %c0_i32_23 : i32 to vector<32x256xi32>
    %50 = arith.cmpi slt, %45, %49 : vector<32x256xi32>
    %c256_i32_24 = arith.constant 256 : i32
    %51 = vector.broadcast %c256_i32_24 : i32 to vector<32x256xi32>
    %52 = arith.addi %45, %51 : vector<32x256xi32>
    %53 = arith.select %50, %52, %45 : vector<32x256xi1>, vector<32x256xi32>
    %54 = vector.shape_cast %53 : vector<32x256xi32> to vector<32x256x1xi32>
    %55 = vector.shape_cast %54 : vector<32x256x1xi32> to vector<32x256xi32>
    %56 = tpu.dynamic_gather %3[%55] in [1] : vector<32x256xf32>, vector<32x256xi32> -> vector<32x256xf32>
    %57 = arith.mulf %56, %48 : vector<32x256xf32>
    %c2_25 = arith.constant 2 : index
    %c0_26 = arith.constant 0 : index
    %c0_27 = arith.constant 0 : index
    %58 = vector.load %arg4[%c2_25, %c0_26, %c0_27] : memref<9x32x32xf32, #tpu.memory_space<vmem>>, vector<1x32x32xf32>
    %59 = vector.shape_cast %58 : vector<1x32x32xf32> to vector<32x32xf32>
    %cst_28 = arith.constant dense<0.000000e+00> : vector<32x256xf32>
    %60 = tpu.matmul %59, %57, %cst_28 {dimension_numbers = #tpu.dot_dimension_numbers<[1], [0], [0], [1], [0, 0, 1, 1], [], []>} : vector<32x32xf32>, vector<32x256xf32>, vector<32x256xf32> -> vector<32x256xf32>
    %61 = arith.addf %42, %60 : vector<32x256xf32>
    %c3 = arith.constant 3 : index
    %c0_29 = arith.constant 0 : index
    %62 = vector.load %arg1[%c3, %c0_29] : memref<9x256xi32, #tpu.memory_space<vmem>>, vector<1x256xi32>
    %63 = vector.shape_cast %62 : vector<1x256xi32> to vector<1x256xi32>
    %64 = vector.broadcast %63 : vector<1x256xi32> to vector<32x256xi32>
    %c3_30 = arith.constant 3 : index
    %c0_31 = arith.constant 0 : index
    %65 = vector.load %arg2[%c3_30, %c0_31] : memref<9x256xf32, #tpu.memory_space<vmem>>, vector<1x256xf32>
    %66 = vector.shape_cast %65 : vector<1x256xf32> to vector<1x256xf32>
    %67 = vector.broadcast %66 : vector<1x256xf32> to vector<32x256xf32>
    %c0_i32_32 = arith.constant 0 : i32
    %68 = vector.broadcast %c0_i32_32 : i32 to vector<32x256xi32>
    %69 = arith.cmpi slt, %64, %68 : vector<32x256xi32>
    %c256_i32_33 = arith.constant 256 : i32
    %70 = vector.broadcast %c256_i32_33 : i32 to vector<32x256xi32>
    %71 = arith.addi %64, %70 : vector<32x256xi32>
    %72 = arith.select %69, %71, %64 : vector<32x256xi1>, vector<32x256xi32>
    %73 = vector.shape_cast %72 : vector<32x256xi32> to vector<32x256x1xi32>
    %74 = vector.shape_cast %73 : vector<32x256x1xi32> to vector<32x256xi32>
    %75 = tpu.dynamic_gather %3[%74] in [1] : vector<32x256xf32>, vector<32x256xi32> -> vector<32x256xf32>
    %76 = arith.mulf %75, %67 : vector<32x256xf32>
    %c3_34 = arith.constant 3 : index
    %c0_35 = arith.constant 0 : index
    %c0_36 = arith.constant 0 : index
    %77 = vector.load %arg4[%c3_34, %c0_35, %c0_36] : memref<9x32x32xf32, #tpu.memory_space<vmem>>, vector<1x32x32xf32>
    %78 = vector.shape_cast %77 : vector<1x32x32xf32> to vector<32x32xf32>
    %cst_37 = arith.constant dense<0.000000e+00> : vector<32x256xf32>
    %79 = tpu.matmul %78, %76, %cst_37 {dimension_numbers = #tpu.dot_dimension_numbers<[1], [0], [0], [1], [0, 0, 1, 1], [], []>} : vector<32x32xf32>, vector<32x256xf32>, vector<32x256xf32> -> vector<32x256xf32>
    %80 = arith.addf %61, %79 : vector<32x256xf32>
    %c4 = arith.constant 4 : index
    %c0_38 = arith.constant 0 : index
    %81 = vector.load %arg1[%c4, %c0_38] : memref<9x256xi32, #tpu.memory_space<vmem>>, vector<1x256xi32>
    %82 = vector.shape_cast %81 : vector<1x256xi32> to vector<1x256xi32>
    %83 = vector.broadcast %82 : vector<1x256xi32> to vector<32x256xi32>
    %c4_39 = arith.constant 4 : index
    %c0_40 = arith.constant 0 : index
    %84 = vector.load %arg2[%c4_39, %c0_40] : memref<9x256xf32, #tpu.memory_space<vmem>>, vector<1x256xf32>
    %85 = vector.shape_cast %84 : vector<1x256xf32> to vector<1x256xf32>
    %86 = vector.broadcast %85 : vector<1x256xf32> to vector<32x256xf32>
    %c0_i32_41 = arith.constant 0 : i32
    %87 = vector.broadcast %c0_i32_41 : i32 to vector<32x256xi32>
    %88 = arith.cmpi slt, %83, %87 : vector<32x256xi32>
    %c256_i32_42 = arith.constant 256 : i32
    %89 = vector.broadcast %c256_i32_42 : i32 to vector<32x256xi32>
    %90 = arith.addi %83, %89 : vector<32x256xi32>
    %91 = arith.select %88, %90, %83 : vector<32x256xi1>, vector<32x256xi32>
    %92 = vector.shape_cast %91 : vector<32x256xi32> to vector<32x256x1xi32>
    %93 = vector.shape_cast %92 : vector<32x256x1xi32> to vector<32x256xi32>
    %94 = tpu.dynamic_gather %3[%93] in [1] : vector<32x256xf32>, vector<32x256xi32> -> vector<32x256xf32>
    %95 = arith.mulf %94, %86 : vector<32x256xf32>
    %c4_43 = arith.constant 4 : index
    %c0_44 = arith.constant 0 : index
    %c0_45 = arith.constant 0 : index
    %96 = vector.load %arg4[%c4_43, %c0_44, %c0_45] : memref<9x32x32xf32, #tpu.memory_space<vmem>>, vector<1x32x32xf32>
    %97 = vector.shape_cast %96 : vector<1x32x32xf32> to vector<32x32xf32>
    %cst_46 = arith.constant dense<0.000000e+00> : vector<32x256xf32>
    %98 = tpu.matmul %97, %95, %cst_46 {dimension_numbers = #tpu.dot_dimension_numbers<[1], [0], [0], [1], [0, 0, 1, 1], [], []>} : vector<32x32xf32>, vector<32x256xf32>, vector<32x256xf32> -> vector<32x256xf32>
    %99 = arith.addf %80, %98 : vector<32x256xf32>
    %c5 = arith.constant 5 : index
    %c0_47 = arith.constant 0 : index
    %100 = vector.load %arg1[%c5, %c0_47] : memref<9x256xi32, #tpu.memory_space<vmem>>, vector<1x256xi32>
    %101 = vector.shape_cast %100 : vector<1x256xi32> to vector<1x256xi32>
    %102 = vector.broadcast %101 : vector<1x256xi32> to vector<32x256xi32>
    %c5_48 = arith.constant 5 : index
    %c0_49 = arith.constant 0 : index
    %103 = vector.load %arg2[%c5_48, %c0_49] : memref<9x256xf32, #tpu.memory_space<vmem>>, vector<1x256xf32>
    %104 = vector.shape_cast %103 : vector<1x256xf32> to vector<1x256xf32>
    %105 = vector.broadcast %104 : vector<1x256xf32> to vector<32x256xf32>
    %c0_i32_50 = arith.constant 0 : i32
    %106 = vector.broadcast %c0_i32_50 : i32 to vector<32x256xi32>
    %107 = arith.cmpi slt, %102, %106 : vector<32x256xi32>
    %c256_i32_51 = arith.constant 256 : i32
    %108 = vector.broadcast %c256_i32_51 : i32 to vector<32x256xi32>
    %109 = arith.addi %102, %108 : vector<32x256xi32>
    %110 = arith.select %107, %109, %102 : vector<32x256xi1>, vector<32x256xi32>
    %111 = vector.shape_cast %110 : vector<32x256xi32> to vector<32x256x1xi32>
    %112 = vector.shape_cast %111 : vector<32x256x1xi32> to vector<32x256xi32>
    %113 = tpu.dynamic_gather %3[%112] in [1] : vector<32x256xf32>, vector<32x256xi32> -> vector<32x256xf32>
    %114 = arith.mulf %113, %105 : vector<32x256xf32>
    %c5_52 = arith.constant 5 : index
    %c0_53 = arith.constant 0 : index
    %c0_54 = arith.constant 0 : index
    %115 = vector.load %arg4[%c5_52, %c0_53, %c0_54] : memref<9x32x32xf32, #tpu.memory_space<vmem>>, vector<1x32x32xf32>
    %116 = vector.shape_cast %115 : vector<1x32x32xf32> to vector<32x32xf32>
    %cst_55 = arith.constant dense<0.000000e+00> : vector<32x256xf32>
    %117 = tpu.matmul %116, %114, %cst_55 {dimension_numbers = #tpu.dot_dimension_numbers<[1], [0], [0], [1], [0, 0, 1, 1], [], []>} : vector<32x32xf32>, vector<32x256xf32>, vector<32x256xf32> -> vector<32x256xf32>
    %118 = arith.addf %99, %117 : vector<32x256xf32>
    %c6 = arith.constant 6 : index
    %c0_56 = arith.constant 0 : index
    %119 = vector.load %arg1[%c6, %c0_56] : memref<9x256xi32, #tpu.memory_space<vmem>>, vector<1x256xi32>
    %120 = vector.shape_cast %119 : vector<1x256xi32> to vector<1x256xi32>
    %121 = vector.broadcast %120 : vector<1x256xi32> to vector<32x256xi32>
    %c6_57 = arith.constant 6 : index
    %c0_58 = arith.constant 0 : index
    %122 = vector.load %arg2[%c6_57, %c0_58] : memref<9x256xf32, #tpu.memory_space<vmem>>, vector<1x256xf32>
    %123 = vector.shape_cast %122 : vector<1x256xf32> to vector<1x256xf32>
    %124 = vector.broadcast %123 : vector<1x256xf32> to vector<32x256xf32>
    %c0_i32_59 = arith.constant 0 : i32
    %125 = vector.broadcast %c0_i32_59 : i32 to vector<32x256xi32>
    %126 = arith.cmpi slt, %121, %125 : vector<32x256xi32>
    %c256_i32_60 = arith.constant 256 : i32
    %127 = vector.broadcast %c256_i32_60 : i32 to vector<32x256xi32>
    %128 = arith.addi %121, %127 : vector<32x256xi32>
    %129 = arith.select %126, %128, %121 : vector<32x256xi1>, vector<32x256xi32>
    %130 = vector.shape_cast %129 : vector<32x256xi32> to vector<32x256x1xi32>
    %131 = vector.shape_cast %130 : vector<32x256x1xi32> to vector<32x256xi32>
    %132 = tpu.dynamic_gather %3[%131] in [1] : vector<32x256xf32>, vector<32x256xi32> -> vector<32x256xf32>
    %133 = arith.mulf %132, %124 : vector<32x256xf32>
    %c6_61 = arith.constant 6 : index
    %c0_62 = arith.constant 0 : index
    %c0_63 = arith.constant 0 : index
    %134 = vector.load %arg4[%c6_61, %c0_62, %c0_63] : memref<9x32x32xf32, #tpu.memory_space<vmem>>, vector<1x32x32xf32>
    %135 = vector.shape_cast %134 : vector<1x32x32xf32> to vector<32x32xf32>
    %cst_64 = arith.constant dense<0.000000e+00> : vector<32x256xf32>
    %136 = tpu.matmul %135, %133, %cst_64 {dimension_numbers = #tpu.dot_dimension_numbers<[1], [0], [0], [1], [0, 0, 1, 1], [], []>} : vector<32x32xf32>, vector<32x256xf32>, vector<32x256xf32> -> vector<32x256xf32>
    %137 = arith.addf %118, %136 : vector<32x256xf32>
    %c7 = arith.constant 7 : index
    %c0_65 = arith.constant 0 : index
    %138 = vector.load %arg1[%c7, %c0_65] : memref<9x256xi32, #tpu.memory_space<vmem>>, vector<1x256xi32>
    %139 = vector.shape_cast %138 : vector<1x256xi32> to vector<1x256xi32>
    %140 = vector.broadcast %139 : vector<1x256xi32> to vector<32x256xi32>
    %c7_66 = arith.constant 7 : index
    %c0_67 = arith.constant 0 : index
    %141 = vector.load %arg2[%c7_66, %c0_67] : memref<9x256xf32, #tpu.memory_space<vmem>>, vector<1x256xf32>
    %142 = vector.shape_cast %141 : vector<1x256xf32> to vector<1x256xf32>
    %143 = vector.broadcast %142 : vector<1x256xf32> to vector<32x256xf32>
    %c0_i32_68 = arith.constant 0 : i32
    %144 = vector.broadcast %c0_i32_68 : i32 to vector<32x256xi32>
    %145 = arith.cmpi slt, %140, %144 : vector<32x256xi32>
    %c256_i32_69 = arith.constant 256 : i32
    %146 = vector.broadcast %c256_i32_69 : i32 to vector<32x256xi32>
    %147 = arith.addi %140, %146 : vector<32x256xi32>
    %148 = arith.select %145, %147, %140 : vector<32x256xi1>, vector<32x256xi32>
    %149 = vector.shape_cast %148 : vector<32x256xi32> to vector<32x256x1xi32>
    %150 = vector.shape_cast %149 : vector<32x256x1xi32> to vector<32x256xi32>
    %151 = tpu.dynamic_gather %3[%150] in [1] : vector<32x256xf32>, vector<32x256xi32> -> vector<32x256xf32>
    %152 = arith.mulf %151, %143 : vector<32x256xf32>
    %c7_70 = arith.constant 7 : index
    %c0_71 = arith.constant 0 : index
    %c0_72 = arith.constant 0 : index
    %153 = vector.load %arg4[%c7_70, %c0_71, %c0_72] : memref<9x32x32xf32, #tpu.memory_space<vmem>>, vector<1x32x32xf32>
    %154 = vector.shape_cast %153 : vector<1x32x32xf32> to vector<32x32xf32>
    %cst_73 = arith.constant dense<0.000000e+00> : vector<32x256xf32>
    %155 = tpu.matmul %154, %152, %cst_73 {dimension_numbers = #tpu.dot_dimension_numbers<[1], [0], [0], [1], [0, 0, 1, 1], [], []>} : vector<32x32xf32>, vector<32x256xf32>, vector<32x256xf32> -> vector<32x256xf32>
    %156 = arith.addf %137, %155 : vector<32x256xf32>
    %c8 = arith.constant 8 : index
    %c0_74 = arith.constant 0 : index
    %157 = vector.load %arg1[%c8, %c0_74] : memref<9x256xi32, #tpu.memory_space<vmem>>, vector<1x256xi32>
    %158 = vector.shape_cast %157 : vector<1x256xi32> to vector<1x256xi32>
    %159 = vector.broadcast %158 : vector<1x256xi32> to vector<32x256xi32>
    %c8_75 = arith.constant 8 : index
    %c0_76 = arith.constant 0 : index
    %160 = vector.load %arg2[%c8_75, %c0_76] : memref<9x256xf32, #tpu.memory_space<vmem>>, vector<1x256xf32>
    %161 = vector.shape_cast %160 : vector<1x256xf32> to vector<1x256xf32>
    %162 = vector.broadcast %161 : vector<1x256xf32> to vector<32x256xf32>
    %c0_i32_77 = arith.constant 0 : i32
    %163 = vector.broadcast %c0_i32_77 : i32 to vector<32x256xi32>
    %164 = arith.cmpi slt, %159, %163 : vector<32x256xi32>
    %c256_i32_78 = arith.constant 256 : i32
    %165 = vector.broadcast %c256_i32_78 : i32 to vector<32x256xi32>
    %166 = arith.addi %159, %165 : vector<32x256xi32>
    %167 = arith.select %164, %166, %159 : vector<32x256xi1>, vector<32x256xi32>
    %168 = vector.shape_cast %167 : vector<32x256xi32> to vector<32x256x1xi32>
    %169 = vector.shape_cast %168 : vector<32x256x1xi32> to vector<32x256xi32>
    %170 = tpu.dynamic_gather %3[%169] in [1] : vector<32x256xf32>, vector<32x256xi32> -> vector<32x256xf32>
    %171 = arith.mulf %170, %162 : vector<32x256xf32>
    %c8_79 = arith.constant 8 : index
    %c0_80 = arith.constant 0 : index
    %c0_81 = arith.constant 0 : index
    %172 = vector.load %arg4[%c8_79, %c0_80, %c0_81] : memref<9x32x32xf32, #tpu.memory_space<vmem>>, vector<1x32x32xf32>
    %173 = vector.shape_cast %172 : vector<1x32x32xf32> to vector<32x32xf32>
    %cst_82 = arith.constant dense<0.000000e+00> : vector<32x256xf32>
    %174 = tpu.matmul %173, %171, %cst_82 {dimension_numbers = #tpu.dot_dimension_numbers<[1], [0], [0], [1], [0, 0, 1, 1], [], []>} : vector<32x32xf32>, vector<32x256xf32>, vector<32x256xf32> -> vector<32x256xf32>
    %175 = arith.addf %156, %174 : vector<32x256xf32>
    %c0_83 = arith.constant 0 : index
    %c0_84 = arith.constant 0 : index
    %176 = vector.load %arg5[%c0_83, %c0_84] : memref<32x1xf32, #tpu.memory_space<vmem>>, vector<32x1xf32>
    %177 = vector.broadcast %176 : vector<32x1xf32> to vector<32x256xf32>
    %178 = arith.addf %175, %177 : vector<32x256xf32>
    %cst_85 = arith.constant 0.000000e+00 : f32
    %179 = vector.broadcast %cst_85 : f32 to vector<32x256xf32>
    %180 = arith.maximumf %178, %179 : vector<32x256xf32>
    %cst_86 = arith.constant 0.000000e+00 : f32
    %181 = vector.broadcast %cst_86 : f32 to vector<32x256xf32>
    %c0_87 = arith.constant 0 : index
    %c0_88 = arith.constant 0 : index
    %182 = vector.load %arg1[%c0_87, %c0_88] : memref<9x256xi32, #tpu.memory_space<vmem>>, vector<1x256xi32>
    %183 = vector.shape_cast %182 : vector<1x256xi32> to vector<1x256xi32>
    %184 = vector.broadcast %183 : vector<1x256xi32> to vector<32x256xi32>
    %c0_89 = arith.constant 0 : index
    %c0_90 = arith.constant 0 : index
    %185 = vector.load %arg2[%c0_89, %c0_90] : memref<9x256xf32, #tpu.memory_space<vmem>>, vector<1x256xf32>
    %186 = vector.shape_cast %185 : vector<1x256xf32> to vector<1x256xf32>
    %187 = vector.broadcast %186 : vector<1x256xf32> to vector<32x256xf32>
    %c0_i32_91 = arith.constant 0 : i32
    %188 = vector.broadcast %c0_i32_91 : i32 to vector<32x256xi32>
    %189 = arith.cmpi slt, %184, %188 : vector<32x256xi32>
    %c256_i32_92 = arith.constant 256 : i32
    %190 = vector.broadcast %c256_i32_92 : i32 to vector<32x256xi32>
    %191 = arith.addi %184, %190 : vector<32x256xi32>
    %192 = arith.select %189, %191, %184 : vector<32x256xi1>, vector<32x256xi32>
    %193 = vector.shape_cast %192 : vector<32x256xi32> to vector<32x256x1xi32>
    %194 = vector.shape_cast %193 : vector<32x256x1xi32> to vector<32x256xi32>
    %195 = tpu.dynamic_gather %180[%194] in [1] : vector<32x256xf32>, vector<32x256xi32> -> vector<32x256xf32>
    %196 = arith.mulf %195, %187 : vector<32x256xf32>
    %c0_93 = arith.constant 0 : index
    %c0_94 = arith.constant 0 : index
    %c0_95 = arith.constant 0 : index
    %197 = vector.load %arg6[%c0_93, %c0_94, %c0_95] : memref<9x32x32xf32, #tpu.memory_space<vmem>>, vector<1x32x32xf32>
    %198 = vector.shape_cast %197 : vector<1x32x32xf32> to vector<32x32xf32>
    %cst_96 = arith.constant dense<0.000000e+00> : vector<32x256xf32>
    %199 = tpu.matmul %198, %196, %cst_96 {dimension_numbers = #tpu.dot_dimension_numbers<[1], [0], [0], [1], [0, 0, 1, 1], [], []>} : vector<32x32xf32>, vector<32x256xf32>, vector<32x256xf32> -> vector<32x256xf32>
    %200 = arith.addf %181, %199 : vector<32x256xf32>
    %c1_97 = arith.constant 1 : index
    %c0_98 = arith.constant 0 : index
    %201 = vector.load %arg1[%c1_97, %c0_98] : memref<9x256xi32, #tpu.memory_space<vmem>>, vector<1x256xi32>
    %202 = vector.shape_cast %201 : vector<1x256xi32> to vector<1x256xi32>
    %203 = vector.broadcast %202 : vector<1x256xi32> to vector<32x256xi32>
    %c1_99 = arith.constant 1 : index
    %c0_100 = arith.constant 0 : index
    %204 = vector.load %arg2[%c1_99, %c0_100] : memref<9x256xf32, #tpu.memory_space<vmem>>, vector<1x256xf32>
    %205 = vector.shape_cast %204 : vector<1x256xf32> to vector<1x256xf32>
    %206 = vector.broadcast %205 : vector<1x256xf32> to vector<32x256xf32>
    %c0_i32_101 = arith.constant 0 : i32
    %207 = vector.broadcast %c0_i32_101 : i32 to vector<32x256xi32>
    %208 = arith.cmpi slt, %203, %207 : vector<32x256xi32>
    %c256_i32_102 = arith.constant 256 : i32
    %209 = vector.broadcast %c256_i32_102 : i32 to vector<32x256xi32>
    %210 = arith.addi %203, %209 : vector<32x256xi32>
    %211 = arith.select %208, %210, %203 : vector<32x256xi1>, vector<32x256xi32>
    %212 = vector.shape_cast %211 : vector<32x256xi32> to vector<32x256x1xi32>
    %213 = vector.shape_cast %212 : vector<32x256x1xi32> to vector<32x256xi32>
    %214 = tpu.dynamic_gather %180[%213] in [1] : vector<32x256xf32>, vector<32x256xi32> -> vector<32x256xf32>
    %215 = arith.mulf %214, %206 : vector<32x256xf32>
    %c1_103 = arith.constant 1 : index
    %c0_104 = arith.constant 0 : index
    %c0_105 = arith.constant 0 : index
    %216 = vector.load %arg6[%c1_103, %c0_104, %c0_105] : memref<9x32x32xf32, #tpu.memory_space<vmem>>, vector<1x32x32xf32>
    %217 = vector.shape_cast %216 : vector<1x32x32xf32> to vector<32x32xf32>
    %cst_106 = arith.constant dense<0.000000e+00> : vector<32x256xf32>
    %218 = tpu.matmul %217, %215, %cst_106 {dimension_numbers = #tpu.dot_dimension_numbers<[1], [0], [0], [1], [0, 0, 1, 1], [], []>} : vector<32x32xf32>, vector<32x256xf32>, vector<32x256xf32> -> vector<32x256xf32>
    %219 = arith.addf %200, %218 : vector<32x256xf32>
    %c2_107 = arith.constant 2 : index
    %c0_108 = arith.constant 0 : index
    %220 = vector.load %arg1[%c2_107, %c0_108] : memref<9x256xi32, #tpu.memory_space<vmem>>, vector<1x256xi32>
    %221 = vector.shape_cast %220 : vector<1x256xi32> to vector<1x256xi32>
    %222 = vector.broadcast %221 : vector<1x256xi32> to vector<32x256xi32>
    %c2_109 = arith.constant 2 : index
    %c0_110 = arith.constant 0 : index
    %223 = vector.load %arg2[%c2_109, %c0_110] : memref<9x256xf32, #tpu.memory_space<vmem>>, vector<1x256xf32>
    %224 = vector.shape_cast %223 : vector<1x256xf32> to vector<1x256xf32>
    %225 = vector.broadcast %224 : vector<1x256xf32> to vector<32x256xf32>
    %c0_i32_111 = arith.constant 0 : i32
    %226 = vector.broadcast %c0_i32_111 : i32 to vector<32x256xi32>
    %227 = arith.cmpi slt, %222, %226 : vector<32x256xi32>
    %c256_i32_112 = arith.constant 256 : i32
    %228 = vector.broadcast %c256_i32_112 : i32 to vector<32x256xi32>
    %229 = arith.addi %222, %228 : vector<32x256xi32>
    %230 = arith.select %227, %229, %222 : vector<32x256xi1>, vector<32x256xi32>
    %231 = vector.shape_cast %230 : vector<32x256xi32> to vector<32x256x1xi32>
    %232 = vector.shape_cast %231 : vector<32x256x1xi32> to vector<32x256xi32>
    %233 = tpu.dynamic_gather %180[%232] in [1] : vector<32x256xf32>, vector<32x256xi32> -> vector<32x256xf32>
    %234 = arith.mulf %233, %225 : vector<32x256xf32>
    %c2_113 = arith.constant 2 : index
    %c0_114 = arith.constant 0 : index
    %c0_115 = arith.constant 0 : index
    %235 = vector.load %arg6[%c2_113, %c0_114, %c0_115] : memref<9x32x32xf32, #tpu.memory_space<vmem>>, vector<1x32x32xf32>
    %236 = vector.shape_cast %235 : vector<1x32x32xf32> to vector<32x32xf32>
    %cst_116 = arith.constant dense<0.000000e+00> : vector<32x256xf32>
    %237 = tpu.matmul %236, %234, %cst_116 {dimension_numbers = #tpu.dot_dimension_numbers<[1], [0], [0], [1], [0, 0, 1, 1], [], []>} : vector<32x32xf32>, vector<32x256xf32>, vector<32x256xf32> -> vector<32x256xf32>
    %238 = arith.addf %219, %237 : vector<32x256xf32>
    %c3_117 = arith.constant 3 : index
    %c0_118 = arith.constant 0 : index
    %239 = vector.load %arg1[%c3_117, %c0_118] : memref<9x256xi32, #tpu.memory_space<vmem>>, vector<1x256xi32>
    %240 = vector.shape_cast %239 : vector<1x256xi32> to vector<1x256xi32>
    %241 = vector.broadcast %240 : vector<1x256xi32> to vector<32x256xi32>
    %c3_119 = arith.constant 3 : index
    %c0_120 = arith.constant 0 : index
    %242 = vector.load %arg2[%c3_119, %c0_120] : memref<9x256xf32, #tpu.memory_space<vmem>>, vector<1x256xf32>
    %243 = vector.shape_cast %242 : vector<1x256xf32> to vector<1x256xf32>
    %244 = vector.broadcast %243 : vector<1x256xf32> to vector<32x256xf32>
    %c0_i32_121 = arith.constant 0 : i32
    %245 = vector.broadcast %c0_i32_121 : i32 to vector<32x256xi32>
    %246 = arith.cmpi slt, %241, %245 : vector<32x256xi32>
    %c256_i32_122 = arith.constant 256 : i32
    %247 = vector.broadcast %c256_i32_122 : i32 to vector<32x256xi32>
    %248 = arith.addi %241, %247 : vector<32x256xi32>
    %249 = arith.select %246, %248, %241 : vector<32x256xi1>, vector<32x256xi32>
    %250 = vector.shape_cast %249 : vector<32x256xi32> to vector<32x256x1xi32>
    %251 = vector.shape_cast %250 : vector<32x256x1xi32> to vector<32x256xi32>
    %252 = tpu.dynamic_gather %180[%251] in [1] : vector<32x256xf32>, vector<32x256xi32> -> vector<32x256xf32>
    %253 = arith.mulf %252, %244 : vector<32x256xf32>
    %c3_123 = arith.constant 3 : index
    %c0_124 = arith.constant 0 : index
    %c0_125 = arith.constant 0 : index
    %254 = vector.load %arg6[%c3_123, %c0_124, %c0_125] : memref<9x32x32xf32, #tpu.memory_space<vmem>>, vector<1x32x32xf32>
    %255 = vector.shape_cast %254 : vector<1x32x32xf32> to vector<32x32xf32>
    %cst_126 = arith.constant dense<0.000000e+00> : vector<32x256xf32>
    %256 = tpu.matmul %255, %253, %cst_126 {dimension_numbers = #tpu.dot_dimension_numbers<[1], [0], [0], [1], [0, 0, 1, 1], [], []>} : vector<32x32xf32>, vector<32x256xf32>, vector<32x256xf32> -> vector<32x256xf32>
    %257 = arith.addf %238, %256 : vector<32x256xf32>
    %c4_127 = arith.constant 4 : index
    %c0_128 = arith.constant 0 : index
    %258 = vector.load %arg1[%c4_127, %c0_128] : memref<9x256xi32, #tpu.memory_space<vmem>>, vector<1x256xi32>
    %259 = vector.shape_cast %258 : vector<1x256xi32> to vector<1x256xi32>
    %260 = vector.broadcast %259 : vector<1x256xi32> to vector<32x256xi32>
    %c4_129 = arith.constant 4 : index
    %c0_130 = arith.constant 0 : index
    %261 = vector.load %arg2[%c4_129, %c0_130] : memref<9x256xf32, #tpu.memory_space<vmem>>, vector<1x256xf32>
    %262 = vector.shape_cast %261 : vector<1x256xf32> to vector<1x256xf32>
    %263 = vector.broadcast %262 : vector<1x256xf32> to vector<32x256xf32>
    %c0_i32_131 = arith.constant 0 : i32
    %264 = vector.broadcast %c0_i32_131 : i32 to vector<32x256xi32>
    %265 = arith.cmpi slt, %260, %264 : vector<32x256xi32>
    %c256_i32_132 = arith.constant 256 : i32
    %266 = vector.broadcast %c256_i32_132 : i32 to vector<32x256xi32>
    %267 = arith.addi %260, %266 : vector<32x256xi32>
    %268 = arith.select %265, %267, %260 : vector<32x256xi1>, vector<32x256xi32>
    %269 = vector.shape_cast %268 : vector<32x256xi32> to vector<32x256x1xi32>
    %270 = vector.shape_cast %269 : vector<32x256x1xi32> to vector<32x256xi32>
    %271 = tpu.dynamic_gather %180[%270] in [1] : vector<32x256xf32>, vector<32x256xi32> -> vector<32x256xf32>
    %272 = arith.mulf %271, %263 : vector<32x256xf32>
    %c4_133 = arith.constant 4 : index
    %c0_134 = arith.constant 0 : index
    %c0_135 = arith.constant 0 : index
    %273 = vector.load %arg6[%c4_133, %c0_134, %c0_135] : memref<9x32x32xf32, #tpu.memory_space<vmem>>, vector<1x32x32xf32>
    %274 = vector.shape_cast %273 : vector<1x32x32xf32> to vector<32x32xf32>
    %cst_136 = arith.constant dense<0.000000e+00> : vector<32x256xf32>
    %275 = tpu.matmul %274, %272, %cst_136 {dimension_numbers = #tpu.dot_dimension_numbers<[1], [0], [0], [1], [0, 0, 1, 1], [], []>} : vector<32x32xf32>, vector<32x256xf32>, vector<32x256xf32> -> vector<32x256xf32>
    %276 = arith.addf %257, %275 : vector<32x256xf32>
    %c5_137 = arith.constant 5 : index
    %c0_138 = arith.constant 0 : index
    %277 = vector.load %arg1[%c5_137, %c0_138] : memref<9x256xi32, #tpu.memory_space<vmem>>, vector<1x256xi32>
    %278 = vector.shape_cast %277 : vector<1x256xi32> to vector<1x256xi32>
    %279 = vector.broadcast %278 : vector<1x256xi32> to vector<32x256xi32>
    %c5_139 = arith.constant 5 : index
    %c0_140 = arith.constant 0 : index
    %280 = vector.load %arg2[%c5_139, %c0_140] : memref<9x256xf32, #tpu.memory_space<vmem>>, vector<1x256xf32>
    %281 = vector.shape_cast %280 : vector<1x256xf32> to vector<1x256xf32>
    %282 = vector.broadcast %281 : vector<1x256xf32> to vector<32x256xf32>
    %c0_i32_141 = arith.constant 0 : i32
    %283 = vector.broadcast %c0_i32_141 : i32 to vector<32x256xi32>
    %284 = arith.cmpi slt, %279, %283 : vector<32x256xi32>
    %c256_i32_142 = arith.constant 256 : i32
    %285 = vector.broadcast %c256_i32_142 : i32 to vector<32x256xi32>
    %286 = arith.addi %279, %285 : vector<32x256xi32>
    %287 = arith.select %284, %286, %279 : vector<32x256xi1>, vector<32x256xi32>
    %288 = vector.shape_cast %287 : vector<32x256xi32> to vector<32x256x1xi32>
    %289 = vector.shape_cast %288 : vector<32x256x1xi32> to vector<32x256xi32>
    %290 = tpu.dynamic_gather %180[%289] in [1] : vector<32x256xf32>, vector<32x256xi32> -> vector<32x256xf32>
    %291 = arith.mulf %290, %282 : vector<32x256xf32>
    %c5_143 = arith.constant 5 : index
    %c0_144 = arith.constant 0 : index
    %c0_145 = arith.constant 0 : index
    %292 = vector.load %arg6[%c5_143, %c0_144, %c0_145] : memref<9x32x32xf32, #tpu.memory_space<vmem>>, vector<1x32x32xf32>
    %293 = vector.shape_cast %292 : vector<1x32x32xf32> to vector<32x32xf32>
    %cst_146 = arith.constant dense<0.000000e+00> : vector<32x256xf32>
    %294 = tpu.matmul %293, %291, %cst_146 {dimension_numbers = #tpu.dot_dimension_numbers<[1], [0], [0], [1], [0, 0, 1, 1], [], []>} : vector<32x32xf32>, vector<32x256xf32>, vector<32x256xf32> -> vector<32x256xf32>
    %295 = arith.addf %276, %294 : vector<32x256xf32>
    %c6_147 = arith.constant 6 : index
    %c0_148 = arith.constant 0 : index
    %296 = vector.load %arg1[%c6_147, %c0_148] : memref<9x256xi32, #tpu.memory_space<vmem>>, vector<1x256xi32>
    %297 = vector.shape_cast %296 : vector<1x256xi32> to vector<1x256xi32>
    %298 = vector.broadcast %297 : vector<1x256xi32> to vector<32x256xi32>
    %c6_149 = arith.constant 6 : index
    %c0_150 = arith.constant 0 : index
    %299 = vector.load %arg2[%c6_149, %c0_150] : memref<9x256xf32, #tpu.memory_space<vmem>>, vector<1x256xf32>
    %300 = vector.shape_cast %299 : vector<1x256xf32> to vector<1x256xf32>
    %301 = vector.broadcast %300 : vector<1x256xf32> to vector<32x256xf32>
    %c0_i32_151 = arith.constant 0 : i32
    %302 = vector.broadcast %c0_i32_151 : i32 to vector<32x256xi32>
    %303 = arith.cmpi slt, %298, %302 : vector<32x256xi32>
    %c256_i32_152 = arith.constant 256 : i32
    %304 = vector.broadcast %c256_i32_152 : i32 to vector<32x256xi32>
    %305 = arith.addi %298, %304 : vector<32x256xi32>
    %306 = arith.select %303, %305, %298 : vector<32x256xi1>, vector<32x256xi32>
    %307 = vector.shape_cast %306 : vector<32x256xi32> to vector<32x256x1xi32>
    %308 = vector.shape_cast %307 : vector<32x256x1xi32> to vector<32x256xi32>
    %309 = tpu.dynamic_gather %180[%308] in [1] : vector<32x256xf32>, vector<32x256xi32> -> vector<32x256xf32>
    %310 = arith.mulf %309, %301 : vector<32x256xf32>
    %c6_153 = arith.constant 6 : index
    %c0_154 = arith.constant 0 : index
    %c0_155 = arith.constant 0 : index
    %311 = vector.load %arg6[%c6_153, %c0_154, %c0_155] : memref<9x32x32xf32, #tpu.memory_space<vmem>>, vector<1x32x32xf32>
    %312 = vector.shape_cast %311 : vector<1x32x32xf32> to vector<32x32xf32>
    %cst_156 = arith.constant dense<0.000000e+00> : vector<32x256xf32>
    %313 = tpu.matmul %312, %310, %cst_156 {dimension_numbers = #tpu.dot_dimension_numbers<[1], [0], [0], [1], [0, 0, 1, 1], [], []>} : vector<32x32xf32>, vector<32x256xf32>, vector<32x256xf32> -> vector<32x256xf32>
    %314 = arith.addf %295, %313 : vector<32x256xf32>
    %c7_157 = arith.constant 7 : index
    %c0_158 = arith.constant 0 : index
    %315 = vector.load %arg1[%c7_157, %c0_158] : memref<9x256xi32, #tpu.memory_space<vmem>>, vector<1x256xi32>
    %316 = vector.shape_cast %315 : vector<1x256xi32> to vector<1x256xi32>
    %317 = vector.broadcast %316 : vector<1x256xi32> to vector<32x256xi32>
    %c7_159 = arith.constant 7 : index
    %c0_160 = arith.constant 0 : index
    %318 = vector.load %arg2[%c7_159, %c0_160] : memref<9x256xf32, #tpu.memory_space<vmem>>, vector<1x256xf32>
    %319 = vector.shape_cast %318 : vector<1x256xf32> to vector<1x256xf32>
    %320 = vector.broadcast %319 : vector<1x256xf32> to vector<32x256xf32>
    %c0_i32_161 = arith.constant 0 : i32
    %321 = vector.broadcast %c0_i32_161 : i32 to vector<32x256xi32>
    %322 = arith.cmpi slt, %317, %321 : vector<32x256xi32>
    %c256_i32_162 = arith.constant 256 : i32
    %323 = vector.broadcast %c256_i32_162 : i32 to vector<32x256xi32>
    %324 = arith.addi %317, %323 : vector<32x256xi32>
    %325 = arith.select %322, %324, %317 : vector<32x256xi1>, vector<32x256xi32>
    %326 = vector.shape_cast %325 : vector<32x256xi32> to vector<32x256x1xi32>
    %327 = vector.shape_cast %326 : vector<32x256x1xi32> to vector<32x256xi32>
    %328 = tpu.dynamic_gather %180[%327] in [1] : vector<32x256xf32>, vector<32x256xi32> -> vector<32x256xf32>
    %329 = arith.mulf %328, %320 : vector<32x256xf32>
    %c7_163 = arith.constant 7 : index
    %c0_164 = arith.constant 0 : index
    %c0_165 = arith.constant 0 : index
    %330 = vector.load %arg6[%c7_163, %c0_164, %c0_165] : memref<9x32x32xf32, #tpu.memory_space<vmem>>, vector<1x32x32xf32>
    %331 = vector.shape_cast %330 : vector<1x32x32xf32> to vector<32x32xf32>
    %cst_166 = arith.constant dense<0.000000e+00> : vector<32x256xf32>
    %332 = tpu.matmul %331, %329, %cst_166 {dimension_numbers = #tpu.dot_dimension_numbers<[1], [0], [0], [1], [0, 0, 1, 1], [], []>} : vector<32x32xf32>, vector<32x256xf32>, vector<32x256xf32> -> vector<32x256xf32>
    %333 = arith.addf %314, %332 : vector<32x256xf32>
    %c8_167 = arith.constant 8 : index
    %c0_168 = arith.constant 0 : index
    %334 = vector.load %arg1[%c8_167, %c0_168] : memref<9x256xi32, #tpu.memory_space<vmem>>, vector<1x256xi32>
    %335 = vector.shape_cast %334 : vector<1x256xi32> to vector<1x256xi32>
    %336 = vector.broadcast %335 : vector<1x256xi32> to vector<32x256xi32>
    %c8_169 = arith.constant 8 : index
    %c0_170 = arith.constant 0 : index
    %337 = vector.load %arg2[%c8_169, %c0_170] : memref<9x256xf32, #tpu.memory_space<vmem>>, vector<1x256xf32>
    %338 = vector.shape_cast %337 : vector<1x256xf32> to vector<1x256xf32>
    %339 = vector.broadcast %338 : vector<1x256xf32> to vector<32x256xf32>
    %c0_i32_171 = arith.constant 0 : i32
    %340 = vector.broadcast %c0_i32_171 : i32 to vector<32x256xi32>
    %341 = arith.cmpi slt, %336, %340 : vector<32x256xi32>
    %c256_i32_172 = arith.constant 256 : i32
    %342 = vector.broadcast %c256_i32_172 : i32 to vector<32x256xi32>
    %343 = arith.addi %336, %342 : vector<32x256xi32>
    %344 = arith.select %341, %343, %336 : vector<32x256xi1>, vector<32x256xi32>
    %345 = vector.shape_cast %344 : vector<32x256xi32> to vector<32x256x1xi32>
    %346 = vector.shape_cast %345 : vector<32x256x1xi32> to vector<32x256xi32>
    %347 = tpu.dynamic_gather %180[%346] in [1] : vector<32x256xf32>, vector<32x256xi32> -> vector<32x256xf32>
    %348 = arith.mulf %347, %339 : vector<32x256xf32>
    %c8_173 = arith.constant 8 : index
    %c0_174 = arith.constant 0 : index
    %c0_175 = arith.constant 0 : index
    %349 = vector.load %arg6[%c8_173, %c0_174, %c0_175] : memref<9x32x32xf32, #tpu.memory_space<vmem>>, vector<1x32x32xf32>
    %350 = vector.shape_cast %349 : vector<1x32x32xf32> to vector<32x32xf32>
    %cst_176 = arith.constant dense<0.000000e+00> : vector<32x256xf32>
    %351 = tpu.matmul %350, %348, %cst_176 {dimension_numbers = #tpu.dot_dimension_numbers<[1], [0], [0], [1], [0, 0, 1, 1], [], []>} : vector<32x32xf32>, vector<32x256xf32>, vector<32x256xf32> -> vector<32x256xf32>
    %352 = arith.addf %333, %351 : vector<32x256xf32>
    %c0_177 = arith.constant 0 : index
    %c0_178 = arith.constant 0 : index
    %353 = vector.load %arg7[%c0_177, %c0_178] : memref<32x1xf32, #tpu.memory_space<vmem>>, vector<32x1xf32>
    %354 = vector.broadcast %353 : vector<32x1xf32> to vector<32x256xf32>
    %355 = arith.addf %352, %354 : vector<32x256xf32>
    %356 = arith.addf %355, %1 : vector<32x256xf32>
    %c0_179 = arith.constant 0 : index
    %c0_180 = arith.constant 0 : index
    %c0_181 = arith.constant 0 : index
    %357 = vector.load %arg8[%c0_179, %c0_180, %c0_181] : memref<1x32x256xf32, #tpu.memory_space<vmem>>, vector<1x32x256xf32>
    %358 = vector.shape_cast %357 : vector<1x32x256xf32> to vector<32x256xf32>
    %359 = vector.shape_cast %356 : vector<32x256xf32> to vector<1x32x256xf32>
    tpu.vector_store %arg8[%c0_179, %c0_180, %c0_181], %359 {strides = array<i32>} : memref<1x32x256xf32, #tpu.memory_space<vmem>>, vector<1x32x256xf32>,
    return
  }
  func.func @transform_0(%arg0: i32) -> (i32, i32) {
    %c0_i32 = arith.constant 0 : i32
    %c0_i32_0 = arith.constant 0 : i32
    %c0_i32_1 = arith.constant 0 : i32
    return %c0_i32, %c0_i32_0 : i32, i32
  }
  func.func @transform_1(%arg0: i32) -> (i32, i32) {
    %c0_i32 = arith.constant 0 : i32
    %c0_i32_0 = arith.constant 0 : i32
    %c0_i32_1 = arith.constant 0 : i32
    return %c0_i32, %c0_i32_0 : i32, i32
  }
  func.func @transform_2(%arg0: i32) -> (i32, i32, i32) {
    %c0_i32 = arith.constant 0 : i32
    %c0_i32_0 = arith.constant 0 : i32
    %c0_i32_1 = arith.constant 0 : i32
    return %arg0, %c0_i32, %c0_i32_0 : i32, i32, i32
  }
  func.func @transform_3(%arg0: i32) -> (i32, i32, i32) {
    %c0_i32 = arith.constant 0 : i32
    %c0_i32_0 = arith.constant 0 : i32
    %c0_i32_1 = arith.constant 0 : i32
    %c0_i32_2 = arith.constant 0 : i32
    return %c0_i32, %c0_i32_0, %c0_i32_1 : i32, i32, i32
  }
  func.func @transform_4(%arg0: i32) -> (i32, i32) {
    %c0_i32 = arith.constant 0 : i32
    %c0_i32_0 = arith.constant 0 : i32
    %c0_i32_1 = arith.constant 0 : i32
    return %c0_i32, %c0_i32_0 : i32, i32
  }
  func.func @transform_5(%arg0: i32) -> (i32, i32, i32) {
    %c0_i32 = arith.constant 0 : i32
    %c0_i32_0 = arith.constant 0 : i32
    %c0_i32_1 = arith.constant 0 : i32
    %c0_i32_2 = arith.constant 0 : i32
    return %c0_i32, %c0_i32_0, %c0_i32_1 : i32, i32, i32
  }
  func.func @transform_6(%arg0: i32) -> (i32, i32) {
    %c0_i32 = arith.constant 0 : i32
    %c0_i32_0 = arith.constant 0 : i32
    %c0_i32_1 = arith.constant 0 : i32
    return %c0_i32, %c0_i32_0 : i32, i32
  }
  func.func @transform_7(%arg0: i32) -> (i32, i32, i32) {
    %c0_i32 = arith.constant 0 : i32
    %c0_i32_0 = arith.constant 0 : i32
    %c0_i32_1 = arith.constant 0 : i32
    return %arg0, %c0_i32, %c0_i32_0 : i32, i32, i32
  }
}

module attributes {stable_mosaic.version = 11 : i64} {
  func.func @_staged_conv1_kernel(%arg0: i32, %arg1: i32, %arg2: memref<1x288x256xf32, #tpu.memory_space<vmem>>, %arg3: memref<32x288xf32, #tpu.memory_space<vmem>>, %arg4: memref<32x1xf32, #tpu.memory_space<vmem>>, %arg5: memref<1x32x256xf32, #tpu.memory_space<vmem>>) attributes {dimension_semantics = [#tpu.dimension_semantics<parallel>, #tpu.dimension_semantics<parallel>], iteration_bounds = array<i64: 2, 1>, scalar_prefetch = 0 : i64, scratch_operands = 0 : i64, tpu.core_type = #tpu.core_type<tc>, window_params = [{transform_indices = @transform_0, window_bounds = array<i64: 1, 288, 256>}, {pipeline_mode = #tpu.pipeline_mode<synchronous>, transform_indices = @transform_1, window_bounds = array<i64: 32, 288>}, {pipeline_mode = #tpu.pipeline_mode<synchronous>, transform_indices = @transform_2, window_bounds = array<i64: 32, 1>}, {transform_indices = @transform_3, window_bounds = array<i64: 1, 32, 256>}]} {
    %c0 = arith.constant 0 : index
    %c0_0 = arith.constant 0 : index
    %0 = vector.load %arg3[%c0, %c0_0] : memref<32x288xf32, #tpu.memory_space<vmem>>, vector<32x288xf32>
    %c0_1 = arith.constant 0 : index
    %c0_2 = arith.constant 0 : index
    %c0_3 = arith.constant 0 : index
    %1 = vector.load %arg2[%c0_1, %c0_2, %c0_3] : memref<1x288x256xf32, #tpu.memory_space<vmem>>, vector<1x288x256xf32>
    %2 = vector.shape_cast %1 : vector<1x288x256xf32> to vector<288x256xf32>
    %cst = arith.constant dense<0.000000e+00> : vector<32x256xf32>
    %3 = tpu.matmul %0, %2, %cst {dimension_numbers = #tpu.dot_dimension_numbers<[1], [0], [0], [1], [0, 0, 1, 1], [], []>} : vector<32x288xf32>, vector<288x256xf32>, vector<32x256xf32> -> vector<32x256xf32>
    %c0_4 = arith.constant 0 : index
    %c0_5 = arith.constant 0 : index
    %4 = vector.load %arg4[%c0_4, %c0_5] : memref<32x1xf32, #tpu.memory_space<vmem>>, vector<32x1xf32>
    %5 = vector.broadcast %4 : vector<32x1xf32> to vector<32x256xf32>
    %6 = arith.addf %3, %5 : vector<32x256xf32>
    %cst_6 = arith.constant 0.000000e+00 : f32
    %7 = vector.broadcast %cst_6 : f32 to vector<32x256xf32>
    %8 = arith.maximumf %6, %7 : vector<32x256xf32>
    %c0_7 = arith.constant 0 : index
    %c0_8 = arith.constant 0 : index
    %c0_9 = arith.constant 0 : index
    %9 = vector.load %arg5[%c0_7, %c0_8, %c0_9] : memref<1x32x256xf32, #tpu.memory_space<vmem>>, vector<1x32x256xf32>
    %10 = vector.shape_cast %9 : vector<1x32x256xf32> to vector<32x256xf32>
    %11 = vector.shape_cast %8 : vector<32x256xf32> to vector<1x32x256xf32>
    tpu.vector_store %arg5[%c0_7, %c0_8, %c0_9], %11 {strides = array<i32>} : memref<1x32x256xf32, #tpu.memory_space<vmem>>, vector<1x32x256xf32>,
    return
  }
  func.func @transform_0(%arg0: i32, %arg1: i32) -> (i32, i32, i32) {
    %c0_i32 = arith.constant 0 : i32
    %c0_i32_0 = arith.constant 0 : i32
    return %arg0, %c0_i32, %arg1 : i32, i32, i32
  }
  func.func @transform_1(%arg0: i32, %arg1: i32) -> (i32, i32) {
    %c0_i32 = arith.constant 0 : i32
    %c0_i32_0 = arith.constant 0 : i32
    %c0_i32_1 = arith.constant 0 : i32
    return %c0_i32, %c0_i32_0 : i32, i32
  }
  func.func @transform_2(%arg0: i32, %arg1: i32) -> (i32, i32) {
    %c0_i32 = arith.constant 0 : i32
    %c0_i32_0 = arith.constant 0 : i32
    %c0_i32_1 = arith.constant 0 : i32
    return %c0_i32, %c0_i32_0 : i32, i32
  }
  func.func @transform_3(%arg0: i32, %arg1: i32) -> (i32, i32, i32) {
    %c0_i32 = arith.constant 0 : i32
    %c0_i32_0 = arith.constant 0 : i32
    return %arg0, %c0_i32, %arg1 : i32, i32, i32
  }
}

module attributes {stable_mosaic.version = 11 : i64} {
  func.func @_staged_conv2_kernel(%arg0: i32, %arg1: i32, %arg2: memref<1x288x256xf32, #tpu.memory_space<vmem>>, %arg3: memref<32x288xf32, #tpu.memory_space<vmem>>, %arg4: memref<32x1xf32, #tpu.memory_space<vmem>>, %arg5: memref<1x32x256xf32, #tpu.memory_space<vmem>>, %arg6: memref<1x32x256xf32, #tpu.memory_space<vmem>>) attributes {dimension_semantics = [#tpu.dimension_semantics<parallel>, #tpu.dimension_semantics<parallel>], iteration_bounds = array<i64: 2, 1>, scalar_prefetch = 0 : i64, scratch_operands = 0 : i64, tpu.core_type = #tpu.core_type<tc>, window_params = [{transform_indices = @transform_0, window_bounds = array<i64: 1, 288, 256>}, {pipeline_mode = #tpu.pipeline_mode<synchronous>, transform_indices = @transform_1, window_bounds = array<i64: 32, 288>}, {pipeline_mode = #tpu.pipeline_mode<synchronous>, transform_indices = @transform_2, window_bounds = array<i64: 32, 1>}, {transform_indices = @transform_3, window_bounds = array<i64: 1, 32, 256>}, {transform_indices = @transform_4, window_bounds = array<i64: 1, 32, 256>}]} {
    %c0 = arith.constant 0 : index
    %c0_0 = arith.constant 0 : index
    %0 = vector.load %arg3[%c0, %c0_0] : memref<32x288xf32, #tpu.memory_space<vmem>>, vector<32x288xf32>
    %c0_1 = arith.constant 0 : index
    %c0_2 = arith.constant 0 : index
    %c0_3 = arith.constant 0 : index
    %1 = vector.load %arg2[%c0_1, %c0_2, %c0_3] : memref<1x288x256xf32, #tpu.memory_space<vmem>>, vector<1x288x256xf32>
    %2 = vector.shape_cast %1 : vector<1x288x256xf32> to vector<288x256xf32>
    %cst = arith.constant dense<0.000000e+00> : vector<32x256xf32>
    %3 = tpu.matmul %0, %2, %cst {dimension_numbers = #tpu.dot_dimension_numbers<[1], [0], [0], [1], [0, 0, 1, 1], [], []>} : vector<32x288xf32>, vector<288x256xf32>, vector<32x256xf32> -> vector<32x256xf32>
    %c0_4 = arith.constant 0 : index
    %c0_5 = arith.constant 0 : index
    %4 = vector.load %arg4[%c0_4, %c0_5] : memref<32x1xf32, #tpu.memory_space<vmem>>, vector<32x1xf32>
    %5 = vector.broadcast %4 : vector<32x1xf32> to vector<32x256xf32>
    %6 = arith.addf %3, %5 : vector<32x256xf32>
    %c0_6 = arith.constant 0 : index
    %c0_7 = arith.constant 0 : index
    %c0_8 = arith.constant 0 : index
    %7 = vector.load %arg5[%c0_6, %c0_7, %c0_8] : memref<1x32x256xf32, #tpu.memory_space<vmem>>, vector<1x32x256xf32>
    %8 = vector.shape_cast %7 : vector<1x32x256xf32> to vector<32x256xf32>
    %9 = arith.addf %6, %8 : vector<32x256xf32>
    %c0_9 = arith.constant 0 : index
    %c0_10 = arith.constant 0 : index
    %c0_11 = arith.constant 0 : index
    %10 = vector.load %arg6[%c0_9, %c0_10, %c0_11] : memref<1x32x256xf32, #tpu.memory_space<vmem>>, vector<1x32x256xf32>
    %11 = vector.shape_cast %10 : vector<1x32x256xf32> to vector<32x256xf32>
    %12 = vector.shape_cast %9 : vector<32x256xf32> to vector<1x32x256xf32>
    tpu.vector_store %arg6[%c0_9, %c0_10, %c0_11], %12 {strides = array<i32>} : memref<1x32x256xf32, #tpu.memory_space<vmem>>, vector<1x32x256xf32>,
    return
  }
  func.func @transform_0(%arg0: i32, %arg1: i32) -> (i32, i32, i32) {
    %c0_i32 = arith.constant 0 : i32
    %c0_i32_0 = arith.constant 0 : i32
    return %arg0, %c0_i32, %arg1 : i32, i32, i32
  }
  func.func @transform_1(%arg0: i32, %arg1: i32) -> (i32, i32) {
    %c0_i32 = arith.constant 0 : i32
    %c0_i32_0 = arith.constant 0 : i32
    %c0_i32_1 = arith.constant 0 : i32
    return %c0_i32, %c0_i32_0 : i32, i32
  }
  func.func @transform_2(%arg0: i32, %arg1: i32) -> (i32, i32) {
    %c0_i32 = arith.constant 0 : i32
    %c0_i32_0 = arith.constant 0 : i32
    %c0_i32_1 = arith.constant 0 : i32
    return %c0_i32, %c0_i32_0 : i32, i32
  }
  func.func @transform_3(%arg0: i32, %arg1: i32) -> (i32, i32, i32) {
    %c0_i32 = arith.constant 0 : i32
    %c0_i32_0 = arith.constant 0 : i32
    return %arg0, %c0_i32, %arg1 : i32, i32, i32
  }
  func.func @transform_4(%arg0: i32, %arg1: i32) -> (i32, i32, i32) {
    %c0_i32 = arith.constant 0 : i32
    %c0_i32_0 = arith.constant 0 : i32
    return %arg0, %c0_i32, %arg1 : i32, i32, i32
  }
}

</mosaic_0001>

<llo_original>
// kernel: residual_conv_block_staged.2
$region0: #{residual_conv_block_staged.2}
  #allocation0 [shape = 'u32[]', space=smem, size = 0x4, offset = 0x4, fixed_abs, tag = 'smem constant byte address 0x4 - core index']
  #allocation1 [shape = 'u32[144,128]{1,0:T(1,128)}', space=vmem, size = 0x12000, scoped, tag = 'internal scratch']
  %s0 = inlined_call_operand.vmem [shape: f32[2,288,256], index: 0, kind: input, shape index: {}]
  %s1 = inlined_call_operand.vmem [shape: f32[32,288], index: 1, kind: input, shape index: {}]
  %s2 = inlined_call_operand.vmem [shape: f32[32,1], index: 2, kind: input, shape index: {}]
  %s3 = inlined_call_operand.vmem [shape: f32[2,32,256], index: 3, kind: output, shape index: {}]
  %s4 = sld [smem:[#allocation0]]
  $region45: #{residual_conv_block_staged.2} parent=0
    _
  %s6 = ssub.s32 1, %s4
  %s7 = scalar_select 0, %s6, %s4
  loop: start=0, step=1, limit=4
  $region2: #{residual_conv_block_staged.2} parent=0 // loop_pre_header
    _
  $region3: #{residual_conv_block_staged.2} parent=0 // loop_header
    %s9 = sphi 0, %s13
    %p10 = scmp.ge.s32.totalorder %s9, 4
    %s16 = sphi 0, %s28
    %s17 = sphi 0, %s24
    %s18 = sphi 0, %s16
    %s19 = sphi 0, %s17
    %s20 = sphi 0, %s18
    %s21 = sphi 0, %s19
    %s33 = sphi 0, %s35
    %s36 = sphi 0, %s33
    %s37 = sphi 0, %s36
    %s53 = sphi 0, %s37
    %s57 = sphi 0, %s57
    %s59 = sphi 0, %s57
    %s60 = sphi 0, %s59
    %s74 = sphi 0, %s60
    %s78 = sphi 0, %s78
    %s80 = sphi 0, %s78
    %s81 = sphi 0, %s80
    %s95 = sphi 0, %s81
    %s103 = sphi 0, %s105
    %s106 = sphi 0, %s103
    %s107 = sphi 0, %s106
    %s123 = sphi 0, %s107
  $region4: #{residual_conv_block_staged.2} parent=0 // loop_header_branch
    %12 = sbr.rel (%p10) target = $region8
  $region5: #{residual_conv_block_staged.2} parent=0 // loop_body
    %s14 = ssub.s32 %s9, 1
    %s15 = ssub.s32 %s9, 2
    %s22 = sadd.s32 1, %s17
    %p23 = scmp.ge.s32.totalorder %s22, 1
    %s24 = scalar_select %p23, 0, %s22
    %s25 = sadd.s32 1, %s16
    %s26 = scalar_select %p23, %s25, %s16
    %p27 = scmp.ge.s32.totalorder %s26, 2
    %s28 = scalar_select %p27, 0, %s26
    %s29 = ssub.s32 %s16, %s28
    %s30 = ssub.s32 %s17, %s24
    %s31 = sor.u32 %s29, %s30
    %p32 = scmp.eq.s32.totalorder %s31, 0
    %s34 = sadd.s32 %s33, 1
    %s35 = scalar_select %p32, %s33, %s34
    %p38 = pneg %p32
    %p39 = scmp.eq.s32.totalorder %s9, 1
    %p40 = por %p38, %p39
    %p41 = scmp.ne.s32.totalorder %s33, %s36
    %p42 = scmp.eq.s32.totalorder %s9, 0
    %p43 = por %p41, %p42
    %p44 = scmp.ne.s32.totalorder %s33, %s36
    %p45 = scmp.eq.s32.totalorder %s14, 1
    %p46 = por %p44, %p45
    %p47 = scmp.ne.s32.totalorder %s36, %s37
    %p48 = scmp.eq.s32.totalorder %s14, 0
    %p49 = por %p47, %p48
    %p50 = scmp.ne.s32.totalorder %s36, %s37
    %p51 = scmp.eq.s32.totalorder %s15, 1
    %p52 = por %p50, %p51
    %p54 = scmp.ne.s32.totalorder %s37, %s53
    %p55 = scmp.eq.s32.totalorder %s15, 0
    %p56 = por %p54, %p55
    %s58 = sadd.s32 %s57, 1
    %p61 = scmp.eq.s32.totalorder %s9, 1
    %p62 = scmp.ne.s32.totalorder %s57, %s59
    %p63 = scmp.eq.s32.totalorder %s9, 0
    %p64 = por %p62, %p63
    %p65 = scmp.ne.s32.totalorder %s57, %s59
    %p66 = scmp.eq.s32.totalorder %s14, 1
    %p67 = por %p65, %p66
    %p68 = scmp.ne.s32.totalorder %s59, %s60
    %p69 = scmp.eq.s32.totalorder %s14, 0
    %p70 = por %p68, %p69
    %p71 = scmp.ne.s32.totalorder %s59, %s60
    %p72 = scmp.eq.s32.totalorder %s15, 1
    %p73 = por %p71, %p72
    %p75 = scmp.ne.s32.totalorder %s60, %s74
    %p76 = scmp.eq.s32.totalorder %s15, 0
    %p77 = por %p75, %p76
    %s79 = sadd.s32 %s78, 1
    %p82 = scmp.eq.s32.totalorder %s9, 1
    %p83 = scmp.ne.s32.totalorder %s78, %s80
    %p84 = scmp.eq.s32.totalorder %s9, 0
    %p85 = por %p83, %p84
    %p86 = scmp.ne.s32.totalorder %s78, %s80
    %p87 = scmp.eq.s32.totalorder %s14, 1
    %p88 = por %p86, %p87
    %p89 = scmp.ne.s32.totalorder %s80, %s81
    %p90 = scmp.eq.s32.totalorder %s14, 0
    %p91 = por %p89, %p90
    %p92 = scmp.ne.s32.totalorder %s80, %s81
    %p93 = scmp.eq.s32.totalorder %s15, 1
    %p94 = por %p92, %p93
    %p96 = scmp.ne.s32.totalorder %s81, %s95
    %p97 = scmp.eq.s32.totalorder %s15, 0
    %p98 = por %p96, %p97
    %s99 = ssub.s32 %s16, %s28
    %s100 = ssub.s32 %s17, %s24
    %s101 = sor.u32 %s99, %s100
    %p102 = scmp.eq.s32.totalorder %s101, 0
    %s104 = sadd.s32 %s103, 1
    %s105 = scalar_select %p102, %s103, %s104
    %p108 = pneg %p102
    %p109 = scmp.eq.s32.totalorder %s9, 1
    %p110 = por %p108, %p109
    %p111 = scmp.ne.s32.totalorder %s103, %s106
    %p112 = scmp.eq.s32.totalorder %s9, 0
    %p113 = por %p111, %p112
    %p114 = scmp.ne.s32.totalorder %s103, %s106
    %p115 = scmp.eq.s32.totalorder %s14, 1
    %p116 = por %p114, %p115
    %p117 = scmp.ne.s32.totalorder %s106, %s107
    %p118 = scmp.eq.s32.totalorder %s14, 0
    %p119 = por %p117, %p118
    %p120 = scmp.ne.s32.totalorder %s106, %s107
    %p121 = scmp.eq.s32.totalorder %s15, 1
    %p122 = por %p120, %p121
    %p124 = scmp.ne.s32.totalorder %s107, %s123
    %p125 = scmp.eq.s32.totalorder %s15, 0
    %p126 = por %p124, %p125
    %p127 = scmp.le.s32.totalorder 1, %s9
    %p128 = scmp.lt.s32.totalorder %s9, 3
    %p129 = pnand %p127, %p128
    %p130 = pneg %p129
    // Predicated region
    $region9: #{residual_conv_block_staged.2} parent=5 // pred_check
      _
    $region10: #{residual_conv_block_staged.2} parent=5 // pred_check_branch
      %132 = sbr.rel (%p129) target = $region12
    $region11: #{residual_conv_block_staged.2} parent=5 // pred_region
      %s133 = ssub.s32 %s9, 1
      // Predicated region
      $region13: #{residual_conv_block_staged.2} parent=11 // pred_check
        %p134 = pneg %p70
      $region14: #{residual_conv_block_staged.2} parent=11 // pred_check_branch
        %136 = sbr.rel (%p134) target = $region16
      $region15: #{residual_conv_block_staged.2} parent=11 // pred_region
        _
      $region16: #{residual_conv_block_staged.2} parent=11 // pred_fallthru
        _
      // Predicated region
      $region17: #{residual_conv_block_staged.2} parent=11 // pred_check
        %p137 = pneg %p91
      $region18: #{residual_conv_block_staged.2} parent=11 // pred_check_branch
        %139 = sbr.rel (%p137) target = $region20
      $region19: #{residual_conv_block_staged.2} parent=11 // pred_region
        _
      $region20: #{residual_conv_block_staged.2} parent=11 // pred_fallthru
        _
    $region12: #{residual_conv_block_staged.2} parent=5 // pred_fallthru
      _
    %p140 = scmp.lt.s32.totalorder %s9, 2
    // Predicated region
    $region21: #{residual_conv_block_staged.2} parent=5 // pred_check
      %p141 = pneg %p140
    $region22: #{residual_conv_block_staged.2} parent=5 // pred_check_branch
      %143 = sbr.rel (%p141) target = $region24
    $region23: #{residual_conv_block_staged.2} parent=5 // pred_region
      // Predicated region
      $region25: #{residual_conv_block_staged.2} parent=23 // pred_check
        %p144 = pneg %p43
      $region26: #{residual_conv_block_staged.2} parent=23 // pred_check_branch
        %146 = sbr.rel (%p144) target = $region28
      $region27: #{residual_conv_block_staged.2} parent=23 // pred_region
        %s147 = smul.u32 2, %s17
        %p148 = scmp.lt.s32.totalorder %s16, 1
        %s149 = scalar_select %p148, %s16, 1
        %p150 = scmp.lt.s32.totalorder %s147, 1
        %s151 = scalar_select %p150, %s147, 1
        %s152 = smul.addr %s149, 72
        %s153 = sadd.s32 %s151, %s152
        %s154 = smul.addr %s153, 8
        %s155 = scalar_lea.vmem %s0, %s154
        %s156 = smul.u32 2, %s17
      $region28: #{residual_conv_block_staged.2} parent=23 // pred_fallthru
        _
    $region24: #{residual_conv_block_staged.2} parent=5 // pred_fallthru
      _
    %p157 = scmp.le.s32.totalorder 1, %s9
    %p158 = scmp.lt.s32.totalorder %s9, 3
    %p159 = pnand %p157, %p158
    %p160 = pneg %p159
    // Predicated region
    $region29: #{residual_conv_block_staged.2} parent=5 // pred_check
      _
    $region30: #{residual_conv_block_staged.2} parent=5 // pred_check_branch
      %162 = sbr.rel (%p159) target = $region32
    $region31: #{residual_conv_block_staged.2} parent=5 // pred_region
      %s163 = ssub.s32 %s9, 1
      %s164 = smul.u32 2, %s19
      %p165 = scmp.lt.s32.totalorder %s18, 1
      %s166 = scalar_select %p165, %s18, 1
      %p167 = scmp.lt.s32.totalorder %s164, 1
      %s168 = scalar_select %p167, %s164, 1
      %s169 = smul.addr %s166, 72
      %s170 = sadd.s32 %s168, %s169
      %s171 = smul.addr %s170, 8
      %s172 = scalar_lea.vmem %s0, %s171
      %p173 = pneg %p49
      %p174 = pneg %p46
      %p175 = pneg %p70
      %p176 = pneg %p67
      %p177 = pneg %p91
      %p178 = pneg %p88
      %p179 = pneg %p119
      %p180 = pneg %p116
      %s181 = smul.u32 2, %s19
      %p182 = scmp.lt.s32.totalorder %s18, 1
      %s183 = scalar_select %p182, %s18, 1
      %p184 = scmp.lt.s32.totalorder %s181, 1
      %s185 = scalar_select %p184, %s181, 1
      %s186 = smul.addr %s183, 8
      %s187 = sadd.s32 %s185, %s186
      %s188 = smul.addr %s187, 8
      %s189 = scalar_lea.vmem %s3, %s188
      %s190 = smul.u32 2, %s19
      %p191 = scmp.lt.s32.totalorder %s18, 1
      %s192 = scalar_select %p191, %s18, 1
      %p193 = scmp.lt.s32.totalorder %s190, 1
      %s194 = scalar_select %p193, %s190, 1
      %s195 = smul.addr %s192, 72
      %s196 = sadd.s32 %s194, %s195
      %s197 = smul.addr %s196, 8
      %s198 = scalar_lea.vmem %s0, %s197
      %s199 = smul.u32 2, %s19
      %s200 = smul.u32 2, %s19
      %p201 = scmp.lt.s32.totalorder %s18, 1
      %s202 = scalar_select %p201, %s18, 1
      %p203 = scmp.lt.s32.totalorder %s200, 1
      %s204 = scalar_select %p203, %s200, 1
      %s205 = smul.addr %s202, 8
      %s206 = sadd.s32 %s204, %s205
      %s207 = smul.addr %s206, 8
      %s208 = scalar_lea.vmem %s3, %s207
      %s209 = smul.u32 2, %s19
      %v210 = vld [vmem:[%s1] sm:$0xff]
      %v211 = vld [vmem:[%s1 + $0x8] sm:$0xff]
      %v212 = vld [vmem:[%s1 + $0x10] sm:$0xff]
      %v213 = vld [vmem:[%s1 + $0x18] sm:$0xff]
      %v214 = vld [vmem:[%s1 + $0x20] sm:$0xff]
      %v215 = vld [vmem:[%s1 + $0x28] sm:$0xff]
      %v216 = vld [vmem:[%s1 + $0x30] sm:$0xff]
      %v217 = vld [vmem:[%s1 + $0x38] sm:$0xff]
      %v218 = vld [vmem:[%s1 + $0x40] sm:$0xff]
      %v219 = vld [vmem:[%s1 + $0x48] sm:$0xff]
      %v220 = vld [vmem:[%s1 + $0x50] sm:$0xff]
      %v221 = vld [vmem:[%s1 + $0x58] sm:$0xff]
      %v222 = vld [vmem:[%s198] sm:$0xff]
      %v223 = vld [vmem:[%s198 + $0x8] sm:$0xff]
      %v224 = vld [vmem:[%s198 + $0x10] sm:$0xff]
      %v225 = vld [vmem:[%s198 + $0x18] sm:$0xff]
      %v226 = vld [vmem:[%s198 + $0x20] sm:$0xff]
      %v227 = vld [vmem:[%s198 + $0x28] sm:$0xff]
      %v228 = vld [vmem:[%s198 + $0x30] sm:$0xff]
      %v229 = vld [vmem:[%s198 + $0x38] sm:$0xff]
      %v230 = vld [vmem:[%s198 + $0x40] sm:$0xff]
      %v231 = vld [vmem:[%s198 + $0x48] sm:$0xff]
      %v232 = vld [vmem:[%s198 + $0x50] sm:$0xff]
      %v233 = vld [vmem:[%s198 + $0x58] sm:$0xff]
      %v234 = vld [vmem:[%s198 + $0x60] sm:$0xff]
      %v235 = vld [vmem:[%s198 + $0x68] sm:$0xff]
      %v236 = vld [vmem:[%s198 + $0x70] sm:$0xff]
      %v237 = vld [vmem:[%s198 + $0x78] sm:$0xff]
      %v238 = vld [vmem:[%s198 + $0x80] sm:$0xff]
      %v239 = vld [vmem:[%s198 + $0x88] sm:$0xff]
      %v240 = vld [vmem:[%s198 + $0x90] sm:$0xff]
      %v241 = vld [vmem:[%s198 + $0x98] sm:$0xff]
      %v242 = vld [vmem:[%s198 + $0xa0] sm:$0xff]
      %v243 = vld [vmem:[%s198 + $0xa8] sm:$0xff]
      %v244 = vld [vmem:[%s198 + $0xb0] sm:$0xff]
      %v245 = vld [vmem:[%s198 + $0xb8] sm:$0xff]
      %v246 = vld [vmem:[%s198 + $0xc0] sm:$0xff]
      %v247 = vld [vmem:[%s198 + $0xc8] sm:$0xff]
      %v248 = vld [vmem:[%s198 + $0xd0] sm:$0xff]
      %v249 = vld [vmem:[%s198 + $0xd8] sm:$0xff]
      %v250 = vld [vmem:[%s198 + $0xe0] sm:$0xff]
      %v251 = vld [vmem:[%s198 + $0xe8] sm:$0xff]
      %v252 = vld [vmem:[%s198 + $0xf0] sm:$0xff]
      %v253 = vld [vmem:[%s198 + $0xf8] sm:$0xff]
      %v254 = vld [vmem:[%s198 + $0x100] sm:$0xff]
      %v255 = vld [vmem:[%s198 + $0x108] sm:$0xff]
      %v256 = vld [vmem:[%s198 + $0x110] sm:$0xff]
      %v257 = vld [vmem:[%s198 + $0x118] sm:$0xff]
      %v258 = vld [vmem:[%s198 + $0x120] sm:$0xff]
      %v259 = vld [vmem:[%s198 + $0x128] sm:$0xff]
      %v260 = vld [vmem:[%s198 + $0x130] sm:$0xff]
      %v261 = vld [vmem:[%s198 + $0x138] sm:$0xff]
      %v262 = vld [vmem:[%s198 + $0x140] sm:$0xff]
      %v263 = vld [vmem:[%s198 + $0x148] sm:$0xff]
      %v264 = vld [vmem:[%s198 + $0x150] sm:$0xff]
      %v265 = vld [vmem:[%s198 + $0x158] sm:$0xff]
      %v266 = vld [vmem:[%s198 + $0x160] sm:$0xff]
      %v267 = vld [vmem:[%s198 + $0x168] sm:$0xff]
      %v268 = vld [vmem:[%s198 + $0x170] sm:$0xff]
      %v269 = vld [vmem:[%s198 + $0x178] sm:$0xff]
      %v270 = vld [vmem:[%s198 + $0x180] sm:$0xff]
      %v271 = vld [vmem:[%s198 + $0x188] sm:$0xff]
      %v272 = vld [vmem:[%s198 + $0x190] sm:$0xff]
      %v273 = vld [vmem:[%s198 + $0x198] sm:$0xff]
      %v274 = vld [vmem:[%s198 + $0x1a0] sm:$0xff]
      %v275 = vld [vmem:[%s198 + $0x1a8] sm:$0xff]
      %v276 = vld [vmem:[%s198 + $0x1b0] sm:$0xff]
      %v277 = vld [vmem:[%s198 + $0x1b8] sm:$0xff]
      %v278 = vld [vmem:[%s198 + $0x1c0] sm:$0xff]
      %v279 = vld [vmem:[%s198 + $0x1c8] sm:$0xff]
      %v280 = vld [vmem:[%s198 + $0x1d0] sm:$0xff]
      %v281 = vld [vmem:[%s198 + $0x1d8] sm:$0xff]
      %v282 = vld [vmem:[%s198 + $0x1e0] sm:$0xff]
      %v283 = vld [vmem:[%s198 + $0x1e8] sm:$0xff]
      %v284 = vld [vmem:[%s198 + $0x1f0] sm:$0xff]
      %v285 = vld [vmem:[%s198 + $0x1f8] sm:$0xff]
      %v286 = vld [vmem:[%s198 + $0x200] sm:$0xff]
      %v287 = vld [vmem:[%s198 + $0x208] sm:$0xff]
      %v288 = vld [vmem:[%s198 + $0x210] sm:$0xff]
      %v289 = vld [vmem:[%s198 + $0x218] sm:$0xff]
      %v290 = vld [vmem:[%s198 + $0x220] sm:$0xff]
      %v291 = vld [vmem:[%s198 + $0x228] sm:$0xff]
      %v292 = vld [vmem:[%s198 + $0x230] sm:$0xff]
      %v293 = vld [vmem:[%s198 + $0x238] sm:$0xff]
      %v294 = vld [vmem:[%s2] sm:$0xff]
      %v295 = vld [vmem:[%s2 + $0x8] sm:$0xff]
      %v296 = vld [vmem:[%s2 + $0x10] sm:$0xff]
      %v297 = vld [vmem:[%s2 + $0x18] sm:$0xff]
      %299 = vset.pattern.permute.xlu0 0
      %300 = vperm.xlu0 %299, %v294
      %v301 = vpop.permute.xlu0 %300
      %304 = vset.pattern.permute.xlu0 0
      %305 = vperm.xlu0 %304, %v295
      %v306 = vpop.permute.xlu0 %305
      %309 = vset.pattern.permute.xlu0 0
      %310 = vperm.xlu0 %309, %v296
      %v311 = vpop.permute.xlu0 %310
      %314 = vset.pattern.permute.xlu0 0
      %315 = vperm.xlu0 %314, %v297
      %v316 = vpop.permute.xlu0 %315
      %vm318 = vcmask 261120
      %v320 = vsel %vm318, %v212, 0
      %v323 = vsel %vm318, %v215, 0
      %v326 = vsel %vm318, %v218, 0
      %v329 = vsel %vm318, %v221, 0
      %331 = vmatprep.subr.mxu0 %v223
      %332 = vmatpush1.msra.mxu0 %v222
      %333 = vmatprep.subr.mxu0 %v225
      %334 = vmatpush1.msra.mxu0 %v224
      %335 = vmatprep.subr.mxu0 %v227
      %336 = vmatpush1.msra.mxu0 %v226
      %337 = vmatprep.subr.mxu0 %v229
      %338 = vmatpush1.msra.mxu0 %v228
      %339 = vmatprep.subr.mxu0 %v231
      %340 = vmatpush1.msra.mxu0 %v230
      %341 = vmatprep.subr.mxu0 %v233
      %342 = vmatpush1.msra.mxu0 %v232
      %343 = vmatprep.subr.mxu0 %v235
      %344 = vmatpush1.msra.mxu0 %v234
      %345 = vmatprep.subr.mxu0 %v237
      %346 = vmatpush1.msra.mxu0 %v236
      %347 = vmatprep.subr.mxu0 %v239
      %348 = vmatpush1.msra.mxu0 %v238
      %349 = vmatprep.subr.mxu0 %v241
      %350 = vmatpush1.msra.mxu0 %v240
      %351 = vmatprep.subr.mxu0 %v243
      %352 = vmatpush1.msra.mxu0 %v242
      %353 = vmatprep.subr.mxu0 %v245
      %354 = vmatpush1.msra.mxu0 %v244
      %355 = vmatprep.subr.mxu0 %v247
      %356 = vmatpush1.msra.mxu0 %v246
      %357 = vmatprep.subr.mxu0 %v249
      %358 = vmatpush1.msra.mxu0 %v248
      %359 = vmatprep.subr.mxu0 %v251
      %360 = vmatpush1.msra.mxu0 %v250
      %361 = vmatprep.subr.mxu0 %v253
      %362 = vmatpush1.msra.mxu0 %v252
      %363 = vmatprep.subr.mxu0 %v255
      %364 = vmatpush1.msra.mxu0 %v254
      %365 = vmatprep.subr.mxu0 %v257
      %366 = vmatpush1.msra.mxu0 %v256
      %367 = vmatprep.subr.mxu0 %v259
      %368 = vmatpush1.msra.mxu0 %v258
      %369 = vmatprep.subr.mxu0 %v261
      %370 = vmatpush1.msra.mxu0 %v260
      %371 = vmatprep.subr.mxu0 %v263
      %372 = vmatpush1.msra.mxu0 %v262
      %373 = vmatprep.subr.mxu0 %v265
      %374 = vmatpush1.msra.mxu0 %v264
      %375 = vmatprep.subr.mxu0 %v267
      %376 = vmatpush1.msra.mxu0 %v266
      %377 = vmatprep.subr.mxu0 %v269
      %378 = vmatpush1.msra.mxu0 %v268
      %379 = vmatprep.subr.mxu0 %v271
      %380 = vmatpush1.msra.mxu0 %v270
      %381 = vmatprep.subr.mxu0 %v273
      %382 = vmatpush1.msra.mxu0 %v272
      %383 = vmatprep.subr.mxu0 %v275
      %384 = vmatpush1.msra.mxu0 %v274
      %385 = vmatprep.subr.mxu0 %v277
      %386 = vmatpush1.msra.mxu0 %v276
      %387 = vmatprep.subr.mxu0 %v279
      %388 = vmatpush1.msra.mxu0 %v278
      %389 = vmatprep.subr.mxu0 %v281
      %390 = vmatpush1.msra.mxu0 %v280
      %391 = vmatprep.subr.mxu0 %v283
      %392 = vmatpush1.msra.mxu0 %v282
      %393 = vmatprep.subr.mxu0 %v285
      %394 = vmatpush1.msra.mxu0 %v284
      %395 = vmatprep.mubr.f32.mxu0 %v211
      %396 = vmatmul.mubr.f32.gmra.mrb[0].mxu0 %v210
      %v397 = vpop.f32.mrb[0].mxu0
      %v398 = vadd.f32 %v301, %v397
      %v399 = vpop.f32.mrb[0].mxu0
      %v400 = vadd.f32 %v301, %v399
      %401 = vmatprep.mubr.f32.mxu0 %v214
      %402 = vmatmul.mubr.f32.gmra.mrb[0].mxu0 %v213
      %v403 = vpop.f32.mrb[0].mxu0
      %v404 = vadd.f32 %v306, %v403
      %v405 = vpop.f32.mrb[0].mxu0
      %v406 = vadd.f32 %v306, %v405
      %407 = vmatprep.mubr.f32.mxu0 %v217
      %408 = vmatmul.mubr.f32.gmra.mrb[0].mxu0 %v216
      %v409 = vpop.f32.mrb[0].mxu0
      %v410 = vadd.f32 %v311, %v409
      %v411 = vpop.f32.mrb[0].mxu0
      %v412 = vadd.f32 %v311, %v411
      %413 = vmatprep.mubr.f32.mxu0 %v220
      %414 = vmatmul.mubr.f32.gmra.mrb[0].mxu0 %v219
      %v415 = vpop.f32.mrb[0].mxu0
      %v416 = vadd.f32 %v316, %v415
      %v417 = vpop.f32.mrb[0].mxu0
      %v418 = vadd.f32 %v316, %v417
      %419 = vdwg.mxu0
      %420 = vmatprep.subr.mxu0 %v287
      %421 = vmatpush1.msra.mxu0 %v286
      %422 = vmatprep.subr.mxu0 %v289
      %423 = vmatpush1.msra.mxu0 %v288
      %424 = vmatprep.subr.mxu0 %v291
      %425 = vmatpush1.msra.mxu0 %v290
      %426 = vmatprep.subr.mxu0 %v293
      %427 = vmatpush1.msra.mxu0 %v292
      %428 = vmatprep.subr.mxu0 0.0
      %429 = vmatpush1.msra.mxu0 0.0
      %430 = vmatprep.subr.mxu0 0.0
      %431 = vmatpush1.msra.mxu0 0.0
      %432 = vmatprep.subr.mxu0 0.0
      %433 = vmatpush1.msra.mxu0 0.0
      %434 = vmatprep.subr.mxu0 0.0
      %435 = vmatpush1.msra.mxu0 0.0
      %436 = vmatprep.subr.mxu0 0.0
      %437 = vmatpush1.msra.mxu0 0.0
      %438 = vmatprep.subr.mxu0 0.0
      %439 = vmatpush1.msra.mxu0 0.0
      %440 = vmatprep.subr.mxu0 0.0
      %441 = vmatpush1.msra.mxu0 0.0
      %442 = vmatprep.subr.mxu0 0.0
      %443 = vmatpush1.msra.mxu0 0.0
      %444 = vmatprep.subr.mxu0 0.0
      %445 = vmatpush1.msra.mxu0 0.0
      %446 = vmatprep.subr.mxu0 0.0
      %447 = vmatpush1.msra.mxu0 0.0
      %448 = vmatprep.subr.mxu0 0.0
      %449 = vmatpush1.msra.mxu0 0.0
      %450 = vmatprep.subr.mxu0 0.0
      %451 = vmatpush1.msra.mxu0 0.0
      %452 = vmatprep.subr.mxu0 0.0
      %453 = vmatpush1.msra.mxu0 0.0
      %454 = vmatprep.subr.mxu0 0.0
      %455 = vmatpush1.msra.mxu0 0.0
      %456 = vmatprep.subr.mxu0 0.0
      %457 = vmatpush1.msra.mxu0 0.0
      %458 = vmatprep.subr.mxu0 0.0
      %459 = vmatpush1.msra.mxu0 0.0
      %460 = vmatprep.subr.mxu0 0.0
      %461 = vmatpush1.msra.mxu0 0.0
      %462 = vmatprep.subr.mxu0 0.0
      %463 = vmatpush1.msra.mxu0 0.0
      %464 = vmatprep.subr.mxu0 0.0
      %465 = vmatpush1.msra.mxu0 0.0
      %466 = vmatprep.subr.mxu0 0.0
      %467 = vmatpush1.msra.mxu0 0.0
      %468 = vmatprep.subr.mxu0 0.0
      %469 = vmatpush1.msra.mxu0 0.0
      %470 = vmatprep.subr.mxu0 0.0
      %471 = vmatpush1.msra.mxu0 0.0
      %472 = vmatprep.subr.mxu0 0.0
      %473 = vmatpush1.msra.mxu0 0.0
      %474 = vmatprep.subr.mxu0 0.0
      %475 = vmatpush1.msra.mxu0 0.0
      %476 = vmatprep.subr.mxu0 0.0
      %477 = vmatpush1.msra.mxu0 0.0
      %478 = vmatprep.subr.mxu0 0.0
      %479 = vmatpush1.msra.mxu0 0.0
      %480 = vmatprep.subr.mxu0 0.0
      %481 = vmatpush1.msra.mxu0 0.0
      %482 = vmatprep.subr.mxu0 0.0
      %483 = vmatpush1.msra.mxu0 0.0
      %484 = vmatprep.mubr.f32.mxu0 0.0
      %485 = vmatmul.mubr.f32.gmra.mrb[0].mxu0 %v320
      %v486 = vpop.f32.mrb[0].mxu0
      %v487 = vadd.f32 %v398, %v486
      %v488 = vpop.f32.mrb[0].mxu0
      %v489 = vadd.f32 %v400, %v488
      %490 = vmatprep.mubr.f32.mxu0 0.0
      %491 = vmatmul.mubr.f32.gmra.mrb[0].mxu0 %v323
      %v492 = vpop.f32.mrb[0].mxu0
      %v493 = vadd.f32 %v404, %v492
      %v494 = vpop.f32.mrb[0].mxu0
      %v495 = vadd.f32 %v406, %v494
      %496 = vmatprep.mubr.f32.mxu0 0.0
      %497 = vmatmul.mubr.f32.gmra.mrb[0].mxu0 %v326
      %v498 = vpop.f32.mrb[0].mxu0
      %v499 = vadd.f32 %v410, %v498
      %v500 = vpop.f32.mrb[0].mxu0
      %v501 = vadd.f32 %v412, %v500
      %502 = vmatprep.mubr.f32.mxu0 0.0
      %503 = vmatmul.mubr.f32.gmra.mrb[0].mxu0 %v329
      %v504 = vpop.f32.mrb[0].mxu0
      %v505 = vadd.f32 %v416, %v504
      %v506 = vpop.f32.mrb[0].mxu0
      %v507 = vadd.f32 %v418, %v506
      %508 = vdwg.mxu0
      %v509 = vmax.f32 %v487, 0.0
      %v510 = vmax.f32 %v489, 0.0
      %v511 = vmax.f32 %v493, 0.0
      %v512 = vmax.f32 %v495, 0.0
      %v513 = vmax.f32 %v499, 0.0
      %v514 = vmax.f32 %v501, 0.0
      %v515 = vmax.f32 %v505, 0.0
      %v516 = vmax.f32 %v507, 0.0
      %517 = vst [vmem:[%s208] sm:$0xff] %v509
      %518 = vst [vmem:[%s208 + $0x8] sm:$0xff] %v510
      %519 = vst [vmem:[%s208 + $0x10] sm:$0xff] %v511
      %520 = vst [vmem:[%s208 + $0x18] sm:$0xff] %v512
      %521 = vst [vmem:[%s208 + $0x20] sm:$0xff] %v513
      %522 = vst [vmem:[%s208 + $0x28] sm:$0xff] %v514
      %523 = vst [vmem:[%s208 + $0x30] sm:$0xff] %v515
      %524 = vst [vmem:[%s208 + $0x38] sm:$0xff] %v516
      %s525 = smul.u32 2, %s19
      %p526 = scmp.lt.s32.totalorder %s18, 1
      %s527 = scalar_select %p526, %s18, 1
      %p528 = scmp.lt.s32.totalorder %s525, 1
      %s529 = scalar_select %p528, %s525, 1
      %s530 = smul.addr %s527, 8
      %s531 = sadd.s32 %s529, %s530
      %s532 = smul.addr %s531, 8
      %s533 = scalar_lea.vmem %s3, %s532
      // Predicated region
      $region33: #{residual_conv_block_staged.2} parent=31 // pred_check
        %p534 = pneg %p116
      $region34: #{residual_conv_block_staged.2} parent=31 // pred_check_branch
        %536 = sbr.rel (%p534) target = $region36
      $region35: #{residual_conv_block_staged.2} parent=31 // pred_region
        %s537 = smul.u32 2, %s19
      $region36: #{residual_conv_block_staged.2} parent=31 // pred_fallthru
        _
    $region32: #{residual_conv_block_staged.2} parent=5 // pred_fallthru
      _
    %p538 = scmp.le.s32.totalorder 2, %s9
    // Predicated region
    $region37: #{residual_conv_block_staged.2} parent=5 // pred_check
      %p539 = pneg %p538
    $region38: #{residual_conv_block_staged.2} parent=5 // pred_check_branch
      %541 = sbr.rel (%p539) target = $region40
    $region39: #{residual_conv_block_staged.2} parent=5 // pred_region
      %s542 = ssub.s32 %s9, 2
      // Predicated region
      $region41: #{residual_conv_block_staged.2} parent=39 // pred_check
        %p543 = pneg %p122
      $region42: #{residual_conv_block_staged.2} parent=39 // pred_check_branch
        %545 = sbr.rel (%p543) target = $region44
      $region43: #{residual_conv_block_staged.2} parent=39 // pred_region
        %s546 = smul.u32 2, %s21
        %p547 = scmp.lt.s32.totalorder %s20, 1
        %s548 = scalar_select %p547, %s20, 1
        %p549 = scmp.lt.s32.totalorder %s546, 1
        %s550 = scalar_select %p549, %s546, 1
        %s551 = smul.addr %s548, 8
        %s552 = sadd.s32 %s550, %s551
        %s553 = smul.addr %s552, 8
        %s554 = scalar_lea.vmem %s3, %s553
      $region44: #{residual_conv_block_staged.2} parent=39 // pred_fallthru
        _
    $region40: #{residual_conv_block_staged.2} parent=5 // pred_fallthru
      _
  $region6: #{residual_conv_block_staged.2} parent=0 // loop_footer
    %s13 = sadd.s32 1, %s9
  $region7: #{residual_conv_block_staged.2} parent=0 // loop_footer_branch
    %8 = sbr.rel target = $region3
  $region8: #{residual_conv_block_staged.2} parent=0 // loop_exit
    _

// kernel: residual_conv_block_staged.3
$region0: #{residual_conv_block_staged.3}
  #allocation0 [shape = 'u32[]', space=smem, size = 0x4, offset = 0x4, fixed_abs, tag = 'smem constant byte address 0x4 - core index']
  #allocation1 [shape = 'u32[144,128]{1,0:T(1,128)}', space=vmem, size = 0x12000, scoped, tag = 'internal scratch']
  %s0 = inlined_call_operand.vmem [shape: f32[2,288,256], index: 0, kind: input, shape index: {}]
  %s1 = inlined_call_operand.vmem [shape: f32[32,288], index: 1, kind: input, shape index: {}]
  %s2 = inlined_call_operand.vmem [shape: f32[32,1], index: 2, kind: input, shape index: {}]
  %s3 = inlined_call_operand.vmem [shape: f32[2,32,256], index: 3, kind: input, shape index: {}]
  %s4 = inlined_call_operand.vmem [shape: f32[2,32,256], index: 4, kind: output, shape index: {}]
  %s5 = sld [smem:[#allocation0]]
  $region49: #{residual_conv_block_staged.3} parent=0
    _
  %s7 = ssub.s32 1, %s5
  %s8 = scalar_select 0, %s7, %s5
  loop: start=0, step=1, limit=4
  $region2: #{residual_conv_block_staged.3} parent=0 // loop_pre_header
    _
  $region3: #{residual_conv_block_staged.3} parent=0 // loop_header
    %s10 = sphi 0, %s14
    %p11 = scmp.ge.s32.totalorder %s10, 4
    %s17 = sphi 0, %s29
    %s18 = sphi 0, %s25
    %s19 = sphi 0, %s17
    %s20 = sphi 0, %s18
    %s21 = sphi 0, %s19
    %s22 = sphi 0, %s20
    %s34 = sphi 0, %s36
    %s37 = sphi 0, %s34
    %s38 = sphi 0, %s37
    %s54 = sphi 0, %s38
    %s58 = sphi 0, %s58
    %s60 = sphi 0, %s58
    %s61 = sphi 0, %s60
    %s75 = sphi 0, %s61
    %s79 = sphi 0, %s79
    %s81 = sphi 0, %s79
    %s82 = sphi 0, %s81
    %s96 = sphi 0, %s82
    %s104 = sphi 0, %s106
    %s107 = sphi 0, %s104
    %s108 = sphi 0, %s107
    %s124 = sphi 0, %s108
    %s132 = sphi 0, %s134
    %s135 = sphi 0, %s132
    %s136 = sphi 0, %s135
    %s152 = sphi 0, %s136
  $region4: #{residual_conv_block_staged.3} parent=0 // loop_header_branch
    %13 = sbr.rel (%p11) target = $region8
  $region5: #{residual_conv_block_staged.3} parent=0 // loop_body
    %s15 = ssub.s32 %s10, 1
    %s16 = ssub.s32 %s10, 2
    %s23 = sadd.s32 1, %s18
    %p24 = scmp.ge.s32.totalorder %s23, 1
    %s25 = scalar_select %p24, 0, %s23
    %s26 = sadd.s32 1, %s17
    %s27 = scalar_select %p24, %s26, %s17
    %p28 = scmp.ge.s32.totalorder %s27, 2
    %s29 = scalar_select %p28, 0, %s27
    %s30 = ssub.s32 %s17, %s29
    %s31 = ssub.s32 %s18, %s25
    %s32 = sor.u32 %s30, %s31
    %p33 = scmp.eq.s32.totalorder %s32, 0
    %s35 = sadd.s32 %s34, 1
    %s36 = scalar_select %p33, %s34, %s35
    %p39 = pneg %p33
    %p40 = scmp.eq.s32.totalorder %s10, 1
    %p41 = por %p39, %p40
    %p42 = scmp.ne.s32.totalorder %s34, %s37
    %p43 = scmp.eq.s32.totalorder %s10, 0
    %p44 = por %p42, %p43
    %p45 = scmp.ne.s32.totalorder %s34, %s37
    %p46 = scmp.eq.s32.totalorder %s15, 1
    %p47 = por %p45, %p46
    %p48 = scmp.ne.s32.totalorder %s37, %s38
    %p49 = scmp.eq.s32.totalorder %s15, 0
    %p50 = por %p48, %p49
    %p51 = scmp.ne.s32.totalorder %s37, %s38
    %p52 = scmp.eq.s32.totalorder %s16, 1
    %p53 = por %p51, %p52
    %p55 = scmp.ne.s32.totalorder %s38, %s54
    %p56 = scmp.eq.s32.totalorder %s16, 0
    %p57 = por %p55, %p56
    %s59 = sadd.s32 %s58, 1
    %p62 = scmp.eq.s32.totalorder %s10, 1
    %p63 = scmp.ne.s32.totalorder %s58, %s60
    %p64 = scmp.eq.s32.totalorder %s10, 0
    %p65 = por %p63, %p64
    %p66 = scmp.ne.s32.totalorder %s58, %s60
    %p67 = scmp.eq.s32.totalorder %s15, 1
    %p68 = por %p66, %p67
    %p69 = scmp.ne.s32.totalorder %s60, %s61
    %p70 = scmp.eq.s32.totalorder %s15, 0
    %p71 = por %p69, %p70
    %p72 = scmp.ne.s32.totalorder %s60, %s61
    %p73 = scmp.eq.s32.totalorder %s16, 1
    %p74 = por %p72, %p73
    %p76 = scmp.ne.s32.totalorder %s61, %s75
    %p77 = scmp.eq.s32.totalorder %s16, 0
    %p78 = por %p76, %p77
    %s80 = sadd.s32 %s79, 1
    %p83 = scmp.eq.s32.totalorder %s10, 1
    %p84 = scmp.ne.s32.totalorder %s79, %s81
    %p85 = scmp.eq.s32.totalorder %s10, 0
    %p86 = por %p84, %p85
    %p87 = scmp.ne.s32.totalorder %s79, %s81
    %p88 = scmp.eq.s32.totalorder %s15, 1
    %p89 = por %p87, %p88
    %p90 = scmp.ne.s32.totalorder %s81, %s82
    %p91 = scmp.eq.s32.totalorder %s15, 0
    %p92 = por %p90, %p91
    %p93 = scmp.ne.s32.totalorder %s81, %s82
    %p94 = scmp.eq.s32.totalorder %s16, 1
    %p95 = por %p93, %p94
    %p97 = scmp.ne.s32.totalorder %s82, %s96
    %p98 = scmp.eq.s32.totalorder %s16, 0
    %p99 = por %p97, %p98
    %s100 = ssub.s32 %s17, %s29
    %s101 = ssub.s32 %s18, %s25
    %s102 = sor.u32 %s100, %s101
    %p103 = scmp.eq.s32.totalorder %s102, 0
    %s105 = sadd.s32 %s104, 1
    %s106 = scalar_select %p103, %s104, %s105
    %p109 = pneg %p103
    %p110 = scmp.eq.s32.totalorder %s10, 1
    %p111 = por %p109, %p110
    %p112 = scmp.ne.s32.totalorder %s104, %s107
    %p113 = scmp.eq.s32.totalorder %s10, 0
    %p114 = por %p112, %p113
    %p115 = scmp.ne.s32.totalorder %s104, %s107
    %p116 = scmp.eq.s32.totalorder %s15, 1
    %p117 = por %p115, %p116
    %p118 = scmp.ne.s32.totalorder %s107, %s108
    %p119 = scmp.eq.s32.totalorder %s15, 0
    %p120 = por %p118, %p119
    %p121 = scmp.ne.s32.totalorder %s107, %s108
    %p122 = scmp.eq.s32.totalorder %s16, 1
    %p123 = por %p121, %p122
    %p125 = scmp.ne.s32.totalorder %s108, %s124
    %p126 = scmp.eq.s32.totalorder %s16, 0
    %p127 = por %p125, %p126
    %s128 = ssub.s32 %s17, %s29
    %s129 = ssub.s32 %s18, %s25
    %s130 = sor.u32 %s128, %s129
    %p131 = scmp.eq.s32.totalorder %s130, 0
    %s133 = sadd.s32 %s132, 1
    %s134 = scalar_select %p131, %s132, %s133
    %p137 = pneg %p131
    %p138 = scmp.eq.s32.totalorder %s10, 1
    %p139 = por %p137, %p138
    %p140 = scmp.ne.s32.totalorder %s132, %s135
    %p141 = scmp.eq.s32.totalorder %s10, 0
    %p142 = por %p140, %p141
    %p143 = scmp.ne.s32.totalorder %s132, %s135
    %p144 = scmp.eq.s32.totalorder %s15, 1
    %p145 = por %p143, %p144
    %p146 = scmp.ne.s32.totalorder %s135, %s136
    %p147 = scmp.eq.s32.totalorder %s15, 0
    %p148 = por %p146, %p147
    %p149 = scmp.ne.s32.totalorder %s135, %s136
    %p150 = scmp.eq.s32.totalorder %s16, 1
    %p151 = por %p149, %p150
    %p153 = scmp.ne.s32.totalorder %s136, %s152
    %p154 = scmp.eq.s32.totalorder %s16, 0
    %p155 = por %p153, %p154
    %p156 = scmp.le.s32.totalorder 1, %s10
    %p157 = scmp.lt.s32.totalorder %s10, 3
    %p158 = pnand %p156, %p157
    %p159 = pneg %p158
    // Predicated region
    $region9: #{residual_conv_block_staged.3} parent=5 // pred_check
      _
    $region10: #{residual_conv_block_staged.3} parent=5 // pred_check_branch
      %161 = sbr.rel (%p158) target = $region12
    $region11: #{residual_conv_block_staged.3} parent=5 // pred_region
      %s162 = ssub.s32 %s10, 1
      // Predicated region
      $region13: #{residual_conv_block_staged.3} parent=11 // pred_check
        %p163 = pneg %p71
      $region14: #{residual_conv_block_staged.3} parent=11 // pred_check_branch
        %165 = sbr.rel (%p163) target = $region16
      $region15: #{residual_conv_block_staged.3} parent=11 // pred_region
        _
      $region16: #{residual_conv_block_staged.3} parent=11 // pred_fallthru
        _
      // Predicated region
      $region17: #{residual_conv_block_staged.3} parent=11 // pred_check
        %p166 = pneg %p92
      $region18: #{residual_conv_block_staged.3} parent=11 // pred_check_branch
        %168 = sbr.rel (%p166) target = $region20
      $region19: #{residual_conv_block_staged.3} parent=11 // pred_region
        _
      $region20: #{residual_conv_block_staged.3} parent=11 // pred_fallthru
        _
    $region12: #{residual_conv_block_staged.3} parent=5 // pred_fallthru
      _
    %p169 = scmp.lt.s32.totalorder %s10, 2
    // Predicated region
    $region21: #{residual_conv_block_staged.3} parent=5 // pred_check
      %p170 = pneg %p169
    $region22: #{residual_conv_block_staged.3} parent=5 // pred_check_branch
      %172 = sbr.rel (%p170) target = $region24
    $region23: #{residual_conv_block_staged.3} parent=5 // pred_region
      // Predicated region
      $region25: #{residual_conv_block_staged.3} parent=23 // pred_check
        %p173 = pneg %p44
      $region26: #{residual_conv_block_staged.3} parent=23 // pred_check_branch
        %175 = sbr.rel (%p173) target = $region28
      $region27: #{residual_conv_block_staged.3} parent=23 // pred_region
        %s176 = smul.u32 2, %s18
        %p177 = scmp.lt.s32.totalorder %s17, 1
        %s178 = scalar_select %p177, %s17, 1
        %p179 = scmp.lt.s32.totalorder %s176, 1
        %s180 = scalar_select %p179, %s176, 1
        %s181 = smul.addr %s178, 72
        %s182 = sadd.s32 %s180, %s181
        %s183 = smul.addr %s182, 8
        %s184 = scalar_lea.vmem %s0, %s183
        %s185 = smul.u32 2, %s18
      $region28: #{residual_conv_block_staged.3} parent=23 // pred_fallthru
        _
      // Predicated region
      $region29: #{residual_conv_block_staged.3} parent=23 // pred_check
        %p186 = pneg %p114
      $region30: #{residual_conv_block_staged.3} parent=23 // pred_check_branch
        %188 = sbr.rel (%p186) target = $region32
      $region31: #{residual_conv_block_staged.3} parent=23 // pred_region
        %s189 = smul.u32 2, %s18
        %p190 = scmp.lt.s32.totalorder %s17, 1
        %s191 = scalar_select %p190, %s17, 1
        %p192 = scmp.lt.s32.totalorder %s189, 1
        %s193 = scalar_select %p192, %s189, 1
        %s194 = smul.addr %s191, 8
        %s195 = sadd.s32 %s193, %s194
        %s196 = smul.addr %s195, 8
        %s197 = scalar_lea.vmem %s3, %s196
        %s198 = smul.u32 2, %s18
      $region32: #{residual_conv_block_staged.3} parent=23 // pred_fallthru
        _
    $region24: #{residual_conv_block_staged.3} parent=5 // pred_fallthru
      _
    %p199 = scmp.le.s32.totalorder 1, %s10
    %p200 = scmp.lt.s32.totalorder %s10, 3
    %p201 = pnand %p199, %p200
    %p202 = pneg %p201
    // Predicated region
    $region33: #{residual_conv_block_staged.3} parent=5 // pred_check
      _
    $region34: #{residual_conv_block_staged.3} parent=5 // pred_check_branch
      %204 = sbr.rel (%p201) target = $region36
    $region35: #{residual_conv_block_staged.3} parent=5 // pred_region
      %s205 = ssub.s32 %s10, 1
      %s206 = smul.u32 2, %s20
      %p207 = scmp.lt.s32.totalorder %s19, 1
      %s208 = scalar_select %p207, %s19, 1
      %p209 = scmp.lt.s32.totalorder %s206, 1
      %s210 = scalar_select %p209, %s206, 1
      %s211 = smul.addr %s208, 72
      %s212 = sadd.s32 %s210, %s211
      %s213 = smul.addr %s212, 8
      %s214 = scalar_lea.vmem %s0, %s213
      %p215 = pneg %p50
      %p216 = pneg %p47
      %p217 = pneg %p71
      %p218 = pneg %p68
      %p219 = pneg %p92
      %p220 = pneg %p89
      %s221 = smul.u32 2, %s20
      %p222 = scmp.lt.s32.totalorder %s19, 1
      %s223 = scalar_select %p222, %s19, 1
      %p224 = scmp.lt.s32.totalorder %s221, 1
      %s225 = scalar_select %p224, %s221, 1
      %s226 = smul.addr %s223, 8
      %s227 = sadd.s32 %s225, %s226
      %s228 = smul.addr %s227, 8
      %s229 = scalar_lea.vmem %s3, %s228
      %p230 = pneg %p120
      %p231 = pneg %p117
      %p232 = pneg %p148
      %p233 = pneg %p145
      %s234 = smul.u32 2, %s20
      %p235 = scmp.lt.s32.totalorder %s19, 1
      %s236 = scalar_select %p235, %s19, 1
      %p237 = scmp.lt.s32.totalorder %s234, 1
      %s238 = scalar_select %p237, %s234, 1
      %s239 = smul.addr %s236, 8
      %s240 = sadd.s32 %s238, %s239
      %s241 = smul.addr %s240, 8
      %s242 = scalar_lea.vmem %s4, %s241
      %s243 = smul.u32 2, %s20
      %p244 = scmp.lt.s32.totalorder %s19, 1
      %s245 = scalar_select %p244, %s19, 1
      %p246 = scmp.lt.s32.totalorder %s243, 1
      %s247 = scalar_select %p246, %s243, 1
      %s248 = smul.addr %s245, 72
      %s249 = sadd.s32 %s247, %s248
      %s250 = smul.addr %s249, 8
      %s251 = scalar_lea.vmem %s0, %s250
      %s252 = smul.u32 2, %s20
      %s253 = smul.u32 2, %s20
      %p254 = scmp.lt.s32.totalorder %s19, 1
      %s255 = scalar_select %p254, %s19, 1
      %p256 = scmp.lt.s32.totalorder %s253, 1
      %s257 = scalar_select %p256, %s253, 1
      %s258 = smul.addr %s255, 8
      %s259 = sadd.s32 %s257, %s258
      %s260 = smul.addr %s259, 8
      %s261 = scalar_lea.vmem %s3, %s260
      %s262 = smul.u32 2, %s20
      %s263 = smul.u32 2, %s20
      %p264 = scmp.lt.s32.totalorder %s19, 1
      %s265 = scalar_select %p264, %s19, 1
      %p266 = scmp.lt.s32.totalorder %s263, 1
      %s267 = scalar_select %p266, %s263, 1
      %s268 = smul.addr %s265, 8
      %s269 = sadd.s32 %s267, %s268
      %s270 = smul.addr %s269, 8
      %s271 = scalar_lea.vmem %s4, %s270
      %s272 = smul.u32 2, %s20
      %v273 = vld [vmem:[%s1] sm:$0xff]
      %v274 = vld [vmem:[%s1 + $0x8] sm:$0xff]
      %v275 = vld [vmem:[%s1 + $0x10] sm:$0xff]
      %v276 = vld [vmem:[%s1 + $0x18] sm:$0xff]
      %v277 = vld [vmem:[%s1 + $0x20] sm:$0xff]
      %v278 = vld [vmem:[%s1 + $0x28] sm:$0xff]
      %v279 = vld [vmem:[%s1 + $0x30] sm:$0xff]
      %v280 = vld [vmem:[%s1 + $0x38] sm:$0xff]
      %v281 = vld [vmem:[%s1 + $0x40] sm:$0xff]
      %v282 = vld [vmem:[%s1 + $0x48] sm:$0xff]
      %v283 = vld [vmem:[%s1 + $0x50] sm:$0xff]
      %v284 = vld [vmem:[%s1 + $0x58] sm:$0xff]
      %v285 = vld [vmem:[%s251] sm:$0xff]
      %v286 = vld [vmem:[%s251 + $0x8] sm:$0xff]
      %v287 = vld [vmem:[%s251 + $0x10] sm:$0xff]
      %v288 = vld [vmem:[%s251 + $0x18] sm:$0xff]
      %v289 = vld [vmem:[%s251 + $0x20] sm:$0xff]
      %v290 = vld [vmem:[%s251 + $0x28] sm:$0xff]
      %v291 = vld [vmem:[%s251 + $0x30] sm:$0xff]
      %v292 = vld [vmem:[%s251 + $0x38] sm:$0xff]
      %v293 = vld [vmem:[%s251 + $0x40] sm:$0xff]
      %v294 = vld [vmem:[%s251 + $0x48] sm:$0xff]
      %v295 = vld [vmem:[%s251 + $0x50] sm:$0xff]
      %v296 = vld [vmem:[%s251 + $0x58] sm:$0xff]
      %v297 = vld [vmem:[%s251 + $0x60] sm:$0xff]
      %v298 = vld [vmem:[%s251 + $0x68] sm:$0xff]
      %v299 = vld [vmem:[%s251 + $0x70] sm:$0xff]
      %v300 = vld [vmem:[%s251 + $0x78] sm:$0xff]
      %v301 = vld [vmem:[%s251 + $0x80] sm:$0xff]
      %v302 = vld [vmem:[%s251 + $0x88] sm:$0xff]
      %v303 = vld [vmem:[%s251 + $0x90] sm:$0xff]
      %v304 = vld [vmem:[%s251 + $0x98] sm:$0xff]
      %v305 = vld [vmem:[%s251 + $0xa0] sm:$0xff]
      %v306 = vld [vmem:[%s251 + $0xa8] sm:$0xff]
      %v307 = vld [vmem:[%s251 + $0xb0] sm:$0xff]
      %v308 = vld [vmem:[%s251 + $0xb8] sm:$0xff]
      %v309 = vld [vmem:[%s251 + $0xc0] sm:$0xff]
      %v310 = vld [vmem:[%s251 + $0xc8] sm:$0xff]
      %v311 = vld [vmem:[%s251 + $0xd0] sm:$0xff]
      %v312 = vld [vmem:[%s251 + $0xd8] sm:$0xff]
      %v313 = vld [vmem:[%s251 + $0xe0] sm:$0xff]
      %v314 = vld [vmem:[%s251 + $0xe8] sm:$0xff]
      %v315 = vld [vmem:[%s251 + $0xf0] sm:$0xff]
      %v316 = vld [vmem:[%s251 + $0xf8] sm:$0xff]
      %v317 = vld [vmem:[%s251 + $0x100] sm:$0xff]
      %v318 = vld [vmem:[%s251 + $0x108] sm:$0xff]
      %v319 = vld [vmem:[%s251 + $0x110] sm:$0xff]
      %v320 = vld [vmem:[%s251 + $0x118] sm:$0xff]
      %v321 = vld [vmem:[%s251 + $0x120] sm:$0xff]
      %v322 = vld [vmem:[%s251 + $0x128] sm:$0xff]
      %v323 = vld [vmem:[%s251 + $0x130] sm:$0xff]
      %v324 = vld [vmem:[%s251 + $0x138] sm:$0xff]
      %v325 = vld [vmem:[%s251 + $0x140] sm:$0xff]
      %v326 = vld [vmem:[%s251 + $0x148] sm:$0xff]
      %v327 = vld [vmem:[%s251 + $0x150] sm:$0xff]
      %v328 = vld [vmem:[%s251 + $0x158] sm:$0xff]
      %v329 = vld [vmem:[%s251 + $0x160] sm:$0xff]
      %v330 = vld [vmem:[%s251 + $0x168] sm:$0xff]
      %v331 = vld [vmem:[%s251 + $0x170] sm:$0xff]
      %v332 = vld [vmem:[%s251 + $0x178] sm:$0xff]
      %v333 = vld [vmem:[%s251 + $0x180] sm:$0xff]
      %v334 = vld [vmem:[%s251 + $0x188] sm:$0xff]
      %v335 = vld [vmem:[%s251 + $0x190] sm:$0xff]
      %v336 = vld [vmem:[%s251 + $0x198] sm:$0xff]
      %v337 = vld [vmem:[%s251 + $0x1a0] sm:$0xff]
      %v338 = vld [vmem:[%s251 + $0x1a8] sm:$0xff]
      %v339 = vld [vmem:[%s251 + $0x1b0] sm:$0xff]
      %v340 = vld [vmem:[%s251 + $0x1b8] sm:$0xff]
      %v341 = vld [vmem:[%s251 + $0x1c0] sm:$0xff]
      %v342 = vld [vmem:[%s251 + $0x1c8] sm:$0xff]
      %v343 = vld [vmem:[%s251 + $0x1d0] sm:$0xff]
      %v344 = vld [vmem:[%s251 + $0x1d8] sm:$0xff]
      %v345 = vld [vmem:[%s251 + $0x1e0] sm:$0xff]
      %v346 = vld [vmem:[%s251 + $0x1e8] sm:$0xff]
      %v347 = vld [vmem:[%s251 + $0x1f0] sm:$0xff]
      %v348 = vld [vmem:[%s251 + $0x1f8] sm:$0xff]
      %v349 = vld [vmem:[%s251 + $0x200] sm:$0xff]
      %v350 = vld [vmem:[%s251 + $0x208] sm:$0xff]
      %v351 = vld [vmem:[%s251 + $0x210] sm:$0xff]
      %v352 = vld [vmem:[%s251 + $0x218] sm:$0xff]
      %v353 = vld [vmem:[%s251 + $0x220] sm:$0xff]
      %v354 = vld [vmem:[%s251 + $0x228] sm:$0xff]
      %v355 = vld [vmem:[%s251 + $0x230] sm:$0xff]
      %v356 = vld [vmem:[%s251 + $0x238] sm:$0xff]
      %v357 = vld [vmem:[%s2] sm:$0xff]
      %v358 = vld [vmem:[%s2 + $0x8] sm:$0xff]
      %v359 = vld [vmem:[%s2 + $0x10] sm:$0xff]
      %v360 = vld [vmem:[%s2 + $0x18] sm:$0xff]
      %362 = vset.pattern.permute.xlu0 0
      %363 = vperm.xlu0 %362, %v357
      %v364 = vpop.permute.xlu0 %363
      %367 = vset.pattern.permute.xlu0 0
      %368 = vperm.xlu0 %367, %v358
      %v369 = vpop.permute.xlu0 %368
      %372 = vset.pattern.permute.xlu0 0
      %373 = vperm.xlu0 %372, %v359
      %v374 = vpop.permute.xlu0 %373
      %377 = vset.pattern.permute.xlu0 0
      %378 = vperm.xlu0 %377, %v360
      %v379 = vpop.permute.xlu0 %378
      %vm381 = vcmask 261120
      %v383 = vsel %vm381, %v275, 0
      %v386 = vsel %vm381, %v278, 0
      %v389 = vsel %vm381, %v281, 0
      %v392 = vsel %vm381, %v284, 0
      %394 = vmatprep.subr.mxu0 %v286
      %395 = vmatpush1.msra.mxu0 %v285
      %396 = vmatprep.subr.mxu0 %v288
      %397 = vmatpush1.msra.mxu0 %v287
      %398 = vmatprep.subr.mxu0 %v290
      %399 = vmatpush1.msra.mxu0 %v289
      %400 = vmatprep.subr.mxu0 %v292
      %401 = vmatpush1.msra.mxu0 %v291
      %402 = vmatprep.subr.mxu0 %v294
      %403 = vmatpush1.msra.mxu0 %v293
      %404 = vmatprep.subr.mxu0 %v296
      %405 = vmatpush1.msra.mxu0 %v295
      %406 = vmatprep.subr.mxu0 %v298
      %407 = vmatpush1.msra.mxu0 %v297
      %408 = vmatprep.subr.mxu0 %v300
      %409 = vmatpush1.msra.mxu0 %v299
      %410 = vmatprep.subr.mxu0 %v302
      %411 = vmatpush1.msra.mxu0 %v301
      %412 = vmatprep.subr.mxu0 %v304
      %413 = vmatpush1.msra.mxu0 %v303
      %414 = vmatprep.subr.mxu0 %v306
      %415 = vmatpush1.msra.mxu0 %v305
      %416 = vmatprep.subr.mxu0 %v308
      %417 = vmatpush1.msra.mxu0 %v307
      %418 = vmatprep.subr.mxu0 %v310
      %419 = vmatpush1.msra.mxu0 %v309
      %420 = vmatprep.subr.mxu0 %v312
      %421 = vmatpush1.msra.mxu0 %v311
      %422 = vmatprep.subr.mxu0 %v314
      %423 = vmatpush1.msra.mxu0 %v313
      %424 = vmatprep.subr.mxu0 %v316
      %425 = vmatpush1.msra.mxu0 %v315
      %426 = vmatprep.subr.mxu0 %v318
      %427 = vmatpush1.msra.mxu0 %v317
      %428 = vmatprep.subr.mxu0 %v320
      %429 = vmatpush1.msra.mxu0 %v319
      %430 = vmatprep.subr.mxu0 %v322
      %431 = vmatpush1.msra.mxu0 %v321
      %432 = vmatprep.subr.mxu0 %v324
      %433 = vmatpush1.msra.mxu0 %v323
      %434 = vmatprep.subr.mxu0 %v326
      %435 = vmatpush1.msra.mxu0 %v325
      %436 = vmatprep.subr.mxu0 %v328
      %437 = vmatpush1.msra.mxu0 %v327
      %438 = vmatprep.subr.mxu0 %v330
      %439 = vmatpush1.msra.mxu0 %v329
      %440 = vmatprep.subr.mxu0 %v332
      %441 = vmatpush1.msra.mxu0 %v331
      %442 = vmatprep.subr.mxu0 %v334
      %443 = vmatpush1.msra.mxu0 %v333
      %444 = vmatprep.subr.mxu0 %v336
      %445 = vmatpush1.msra.mxu0 %v335
      %446 = vmatprep.subr.mxu0 %v338
      %447 = vmatpush1.msra.mxu0 %v337
      %448 = vmatprep.subr.mxu0 %v340
      %449 = vmatpush1.msra.mxu0 %v339
      %450 = vmatprep.subr.mxu0 %v342
      %451 = vmatpush1.msra.mxu0 %v341
      %452 = vmatprep.subr.mxu0 %v344
      %453 = vmatpush1.msra.mxu0 %v343
      %454 = vmatprep.subr.mxu0 %v346
      %455 = vmatpush1.msra.mxu0 %v345
      %456 = vmatprep.subr.mxu0 %v348
      %457 = vmatpush1.msra.mxu0 %v347
      %458 = vmatprep.mubr.f32.mxu0 %v274
      %459 = vmatmul.mubr.f32.gmra.mrb[0].mxu0 %v273
      %v460 = vpop.f32.mrb[0].mxu0
      %v461 = vadd.f32 %v364, %v460
      %v462 = vpop.f32.mrb[0].mxu0
      %v463 = vadd.f32 %v364, %v462
      %464 = vmatprep.mubr.f32.mxu0 %v277
      %465 = vmatmul.mubr.f32.gmra.mrb[0].mxu0 %v276
      %v466 = vpop.f32.mrb[0].mxu0
      %v467 = vadd.f32 %v369, %v466
      %v468 = vpop.f32.mrb[0].mxu0
      %v469 = vadd.f32 %v369, %v468
      %470 = vmatprep.mubr.f32.mxu0 %v280
      %471 = vmatmul.mubr.f32.gmra.mrb[0].mxu0 %v279
      %v472 = vpop.f32.mrb[0].mxu0
      %v473 = vadd.f32 %v374, %v472
      %v474 = vpop.f32.mrb[0].mxu0
      %v475 = vadd.f32 %v374, %v474
      %476 = vmatprep.mubr.f32.mxu0 %v283
      %477 = vmatmul.mubr.f32.gmra.mrb[0].mxu0 %v282
      %v478 = vpop.f32.mrb[0].mxu0
      %v479 = vadd.f32 %v379, %v478
      %v480 = vpop.f32.mrb[0].mxu0
      %v481 = vadd.f32 %v379, %v480
      %482 = vdwg.mxu0
      %483 = vmatprep.subr.mxu0 %v350
      %484 = vmatpush1.msra.mxu0 %v349
      %485 = vmatprep.subr.mxu0 %v352
      %486 = vmatpush1.msra.mxu0 %v351
      %487 = vmatprep.subr.mxu0 %v354
      %488 = vmatpush1.msra.mxu0 %v353
      %489 = vmatprep.subr.mxu0 %v356
      %490 = vmatpush1.msra.mxu0 %v355
      %491 = vmatprep.subr.mxu0 0.0
      %492 = vmatpush1.msra.mxu0 0.0
      %493 = vmatprep.subr.mxu0 0.0
      %494 = vmatpush1.msra.mxu0 0.0
      %495 = vmatprep.subr.mxu0 0.0
      %496 = vmatpush1.msra.mxu0 0.0
      %497 = vmatprep.subr.mxu0 0.0
      %498 = vmatpush1.msra.mxu0 0.0
      %499 = vmatprep.subr.mxu0 0.0
      %500 = vmatpush1.msra.mxu0 0.0
      %501 = vmatprep.subr.mxu0 0.0
      %502 = vmatpush1.msra.mxu0 0.0
      %503 = vmatprep.subr.mxu0 0.0
      %504 = vmatpush1.msra.mxu0 0.0
      %505 = vmatprep.subr.mxu0 0.0
      %506 = vmatpush1.msra.mxu0 0.0
      %507 = vmatprep.subr.mxu0 0.0
      %508 = vmatpush1.msra.mxu0 0.0
      %509 = vmatprep.subr.mxu0 0.0
      %510 = vmatpush1.msra.mxu0 0.0
      %511 = vmatprep.subr.mxu0 0.0
      %512 = vmatpush1.msra.mxu0 0.0
      %513 = vmatprep.subr.mxu0 0.0
      %514 = vmatpush1.msra.mxu0 0.0
      %515 = vmatprep.subr.mxu0 0.0
      %516 = vmatpush1.msra.mxu0 0.0
      %517 = vmatprep.subr.mxu0 0.0
      %518 = vmatpush1.msra.mxu0 0.0
      %519 = vmatprep.subr.mxu0 0.0
      %520 = vmatpush1.msra.mxu0 0.0
      %521 = vmatprep.subr.mxu0 0.0
      %522 = vmatpush1.msra.mxu0 0.0
      %523 = vmatprep.subr.mxu0 0.0
      %524 = vmatpush1.msra.mxu0 0.0
      %525 = vmatprep.subr.mxu0 0.0
      %526 = vmatpush1.msra.mxu0 0.0
      %527 = vmatprep.subr.mxu0 0.0
      %528 = vmatpush1.msra.mxu0 0.0
      %529 = vmatprep.subr.mxu0 0.0
      %530 = vmatpush1.msra.mxu0 0.0
      %531 = vmatprep.subr.mxu0 0.0
      %532 = vmatpush1.msra.mxu0 0.0
      %533 = vmatprep.subr.mxu0 0.0
      %534 = vmatpush1.msra.mxu0 0.0
      %535 = vmatprep.subr.mxu0 0.0
      %536 = vmatpush1.msra.mxu0 0.0
      %537 = vmatprep.subr.mxu0 0.0
      %538 = vmatpush1.msra.mxu0 0.0
      %539 = vmatprep.subr.mxu0 0.0
      %540 = vmatpush1.msra.mxu0 0.0
      %541 = vmatprep.subr.mxu0 0.0
      %542 = vmatpush1.msra.mxu0 0.0
      %543 = vmatprep.subr.mxu0 0.0
      %544 = vmatpush1.msra.mxu0 0.0
      %545 = vmatprep.subr.mxu0 0.0
      %546 = vmatpush1.msra.mxu0 0.0
      %547 = vmatprep.mubr.f32.mxu0 0.0
      %548 = vmatmul.mubr.f32.gmra.mrb[0].mxu0 %v383
      %v549 = vpop.f32.mrb[0].mxu0
      %v550 = vadd.f32 %v461, %v549
      %v551 = vpop.f32.mrb[0].mxu0
      %v552 = vadd.f32 %v463, %v551
      %553 = vmatprep.mubr.f32.mxu0 0.0
      %554 = vmatmul.mubr.f32.gmra.mrb[0].mxu0 %v386
      %v555 = vpop.f32.mrb[0].mxu0
      %v556 = vadd.f32 %v467, %v555
      %v557 = vpop.f32.mrb[0].mxu0
      %v558 = vadd.f32 %v469, %v557
      %559 = vmatprep.mubr.f32.mxu0 0.0
      %560 = vmatmul.mubr.f32.gmra.mrb[0].mxu0 %v389
      %v561 = vpop.f32.mrb[0].mxu0
      %v562 = vadd.f32 %v473, %v561
      %v563 = vpop.f32.mrb[0].mxu0
      %v564 = vadd.f32 %v475, %v563
      %565 = vmatprep.mubr.f32.mxu0 0.0
      %566 = vmatmul.mubr.f32.gmra.mrb[0].mxu0 %v392
      %v567 = vpop.f32.mrb[0].mxu0
      %v568 = vadd.f32 %v479, %v567
      %v569 = vpop.f32.mrb[0].mxu0
      %v570 = vadd.f32 %v481, %v569
      %571 = vdwg.mxu0
      %v572 = vld [vmem:[%s261] sm:$0xff]
      %v573 = vld [vmem:[%s261 + $0x8] sm:$0xff]
      %v574 = vld [vmem:[%s261 + $0x10] sm:$0xff]
      %v575 = vld [vmem:[%s261 + $0x18] sm:$0xff]
      %v576 = vld [vmem:[%s261 + $0x20] sm:$0xff]
      %v577 = vld [vmem:[%s261 + $0x28] sm:$0xff]
      %v578 = vld [vmem:[%s261 + $0x30] sm:$0xff]
      %v579 = vld [vmem:[%s261 + $0x38] sm:$0xff]
      %v580 = vadd.f32 %v550, %v572
      %v581 = vadd.f32 %v552, %v573
      %v582 = vadd.f32 %v556, %v574
      %v583 = vadd.f32 %v558, %v575
      %v584 = vadd.f32 %v562, %v576
      %v585 = vadd.f32 %v564, %v577
      %v586 = vadd.f32 %v568, %v578
      %v587 = vadd.f32 %v570, %v579
      %588 = vst [vmem:[%s271] sm:$0xff] %v580
      %589 = vst [vmem:[%s271 + $0x8] sm:$0xff] %v581
      %590 = vst [vmem:[%s271 + $0x10] sm:$0xff] %v582
      %591 = vst [vmem:[%s271 + $0x18] sm:$0xff] %v583
      %592 = vst [vmem:[%s271 + $0x20] sm:$0xff] %v584
      %593 = vst [vmem:[%s271 + $0x28] sm:$0xff] %v585
      %594 = vst [vmem:[%s271 + $0x30] sm:$0xff] %v586
      %595 = vst [vmem:[%s271 + $0x38] sm:$0xff] %v587
      %s596 = smul.u32 2, %s20
      %p597 = scmp.lt.s32.totalorder %s19, 1
      %s598 = scalar_select %p597, %s19, 1
      %p599 = scmp.lt.s32.totalorder %s596, 1
      %s600 = scalar_select %p599, %s596, 1
      %s601 = smul.addr %s598, 8
      %s602 = sadd.s32 %s600, %s601
      %s603 = smul.addr %s602, 8
      %s604 = scalar_lea.vmem %s4, %s603
      // Predicated region
      $region37: #{residual_conv_block_staged.3} parent=35 // pred_check
        %p605 = pneg %p145
      $region38: #{residual_conv_block_staged.3} parent=35 // pred_check_branch
        %607 = sbr.rel (%p605) target = $region40
      $region39: #{residual_conv_block_staged.3} parent=35 // pred_region
        %s608 = smul.u32 2, %s20
      $region40: #{residual_conv_block_staged.3} parent=35 // pred_fallthru
        _
    $region36: #{residual_conv_block_staged.3} parent=5 // pred_fallthru
      _
    %p609 = scmp.le.s32.totalorder 2, %s10
    // Predicated region
    $region41: #{residual_conv_block_staged.3} parent=5 // pred_check
      %p610 = pneg %p609
    $region42: #{residual_conv_block_staged.3} parent=5 // pred_check_branch
      %612 = sbr.rel (%p610) target = $region44
    $region43: #{residual_conv_block_staged.3} parent=5 // pred_region
      %s613 = ssub.s32 %s10, 2
      // Predicated region
      $region45: #{residual_conv_block_staged.3} parent=43 // pred_check
        %p614 = pneg %p151
      $region46: #{residual_conv_block_staged.3} parent=43 // pred_check_branch
        %616 = sbr.rel (%p614) target = $region48
      $region47: #{residual_conv_block_staged.3} parent=43 // pred_region
        %s617 = smul.u32 2, %s22
        %p618 = scmp.lt.s32.totalorder %s21, 1
        %s619 = scalar_select %p618, %s21, 1
        %p620 = scmp.lt.s32.totalorder %s617, 1
        %s621 = scalar_select %p620, %s617, 1
        %s622 = smul.addr %s619, 8
        %s623 = sadd.s32 %s621, %s622
        %s624 = smul.addr %s623, 8
        %s625 = scalar_lea.vmem %s4, %s624
      $region48: #{residual_conv_block_staged.3} parent=43 // pred_fallthru
        _
    $region44: #{residual_conv_block_staged.3} parent=5 // pred_fallthru
      _
  $region6: #{residual_conv_block_staged.3} parent=0 // loop_footer
    %s14 = sadd.s32 1, %s10
  $region7: #{residual_conv_block_staged.3} parent=0 // loop_footer_branch
    %9 = sbr.rel target = $region3
  $region8: #{residual_conv_block_staged.3} parent=0 // loop_exit
    _

</llo_original>
